<compile_context>
chip_gen: v6e
topology: v6e:2x2x1
jax: 0.10.0
libtpu: 0.0.40
codegen_flags: <defaults>
</compile_context>

<pallas_src>
import jax
import jax.numpy as jnp
from jax.experimental import pallas as pl
from jax.experimental.pallas import tpu as pltpu

TEMPERATURE = 0.5
EPS = 1e-12          # F.normalize default eps
NEG = -1e30          # finite "-inf": exp() underflows to exactly 0, no nan/inf math


def _round_up(x, m):
    return (x + m - 1) // m * m


def _make_ntxent_kernel(B, B_pad, blk, num_q, inv_t, resident):
    """Kernel closure over the static sizes / temperature / k-residency mode."""
    half = B_pad // blk

    def kernel(zq_ref, zk_ref, out_ref, m_ref, l_ref, pos_ref):
        qi = pl.program_id(0)
        ki = pl.program_id(1)
        nk = pl.num_programs(1)

        # ---- per-q-tile init on the first k step ----
        @pl.when(ki == 0)
        def _():
            m_ref[...] = jnp.full((blk, 1), NEG, jnp.float32)
            l_ref[...] = jnp.zeros((blk, 1), jnp.float32)

        # pre-normalized bf16 rows: no in-kernel normalization / casts
        qb = zq_ref[...]                                        # (blk, D_pad) bf16
        if resident:
            off = pl.multiple_of(ki * blk, 128)
            kb = zk_ref[pl.ds(off, blk), :]                     # slice resident z
        else:
            kb = zk_ref[...]                                    # streamed k tile

        # similarity tile on the MXU (bf16 x bf16 -> f32 accumulation)
        s = jax.lax.dot_general(qb, kb, (((1,), (1,)), ((), ())),
                                preferred_element_type=jnp.float32) * inv_t

        lrow = jax.lax.broadcasted_iota(jnp.int32, (blk, 1), 0)   # tile-local row
        lcol = jax.lax.broadcasted_iota(jnp.int32, (1, blk), 1)   # tile-local col
        grow = qi * blk + lrow                                    # global row
        gcol = ki * blk + lcol                                    # global col

        # ---- positive logit: tile-local diagonal of the partner tile (raw s) ----
        @pl.when(ki == (qi + half) % num_q)
        def _():
            pos_ref[...] = jnp.sum(jnp.where(lrow == lcol, s, 0.0),
                                   axis=-1, keepdims=True)

        # mask self-similarity diagonal and padded columns (single select)
        col_pad = (gcol % B_pad) >= B
        s = jnp.where((grow == gcol) | col_pad, NEG, s)

        # ---- online logsumexp update ----
        m_prev = m_ref[...]
        m_new = jnp.maximum(m_prev, jnp.max(s, axis=-1, keepdims=True))
        p_exp = jnp.exp(s - m_new)            # masked entries underflow to exactly 0
        alpha = jnp.exp(m_prev - m_new)
        l_ref[...] = alpha * l_ref[...] + jnp.sum(p_exp, axis=-1, keepdims=True)
        m_ref[...] = m_new

        # ---- finalize per-row loss on the last k step (0 for padded rows) ----
        @pl.when(ki == nk - 1)
        def _():
            lse = m_ref[...] + jnp.log(l_ref[...])
            row_ok = (grow % B_pad) < B
            out_ref[...] = jnp.where(row_ok, lse - pos_ref[...], 0.0)

    return kernel


def ntxent_loss(z_i, z_j, temperature=TEMPERATURE, block=512, k_resident=None):
    assert z_i.ndim == 2 and z_i.shape == z_j.shape
    B, D = z_i.shape
    D_pad = _round_up(max(D, 1), 128)

    # ---- generation-aware VMEM budget ------------------------------------
    try:
        vmem_cap = int(pltpu.get_tpu_info().vmem_capacity_bytes)
    except Exception:                                   # pragma: no cover
        vmem_cap = 64 * 1024 * 1024                     # conservative (v7x-sized)
    vmem_limit = min(vmem_cap * 3 // 4, 96 * 1024 * 1024)  # ~96 MiB v5e/v6e, ~48 MiB v7x
    budget = int(vmem_limit * 0.6)                      # headroom for compiler temporaries

    def vmem_need(b, n_pad, resident):
        q_bytes = 2 * b * D_pad * 2                                 # bf16, double-buffered
        k_bytes = 2 * (n_pad if resident else b) * D_pad * 2
        out_bytes = 2 * b * 128 * 4                                 # (blk,1) lane-padded
        scr_bytes = 3 * b * 128 * 4                                 # m / l / pos scratch
        tmp_bytes = 6 * b * b * 4                                   # s, exp, masks, slack
        return q_bytes + k_bytes + out_bytes + scr_bytes + tmp_bytes

    # ---- tile size: multiple of 128, as large as the VMEM budget allows ----
    blk = max(128, min(_round_up(block, 128), _round_up(B, 128)))
    while blk > 128 and vmem_need(blk, 0, False) > budget:
        blk -= 128

    B_pad = _round_up(B, blk)
    N_pad = 2 * B_pad
    num_q = N_pad // blk

    # keep the whole normalized bf16 z resident in VMEM when it comfortably fits
    if k_resident is None:
        k_resident = (2 * N_pad * D_pad * 2 <= 24 * 1024 * 1024 and
                      vmem_need(blk, N_pad, True) <= budget)

    # ---- one O(N*D) pre-pass: normalize in f32, pad, cast to bf16 ----------
    def _norm(x):
        x = x.astype(jnp.float32)
        inv = jax.lax.rsqrt(jnp.maximum(jnp.sum(x * x, axis=-1, keepdims=True),
                                        EPS * EPS))
        return x * inv

    zi = jnp.pad(_norm(z_i), ((0, B_pad - B), (0, D_pad - D)))
    zj = jnp.pad(_norm(z_j), ((0, B_pad - B), (0, D_pad - D)))
    z = jnp.concatenate([zi, zj], axis=0).astype(jnp.bfloat16)       # (N_pad, D_pad)

    kernel = _make_ntxent_kernel(B, B_pad, blk, num_q, 1.0 / temperature, k_resident)

    if k_resident:
        # constant block index -> DMA'd from HBM exactly once, stays resident
        k_spec = pl.BlockSpec((N_pad, D_pad), lambda qi, ki: (0, 0))
    else:
        k_spec = pl.BlockSpec((blk, D_pad), lambda qi, ki: (ki, 0))

    grid_spec = pltpu.PrefetchScalarGridSpec(
        num_scalar_prefetch=0,
        grid=(num_q, num_q),                                         # (q tiles, k tiles)
        in_specs=[
            pl.BlockSpec((blk, D_pad), lambda qi, ki: (qi, 0)),      # q rows (per-qi fetch)
            k_spec,                                                  # k rows
        ],
        out_specs=pl.BlockSpec((blk, 1), lambda qi, ki: (qi, 0)),
        scratch_shapes=[
            pltpu.VMEM((blk, 1), jnp.float32),   # running max m
            pltpu.VMEM((blk, 1), jnp.float32),   # running sum l
            pltpu.VMEM((blk, 1), jnp.float32),   # positive logit
        ],
    )

    per_row = pl.pallas_call(
        kernel,
        out_shape=jax.ShapeDtypeStruct((N_pad, 1), jnp.float32),
        grid_spec=grid_spec,
        compiler_params=pltpu.CompilerParams(
            dimension_semantics=("parallel", "arbitrary"),
            vmem_limit_bytes=int(vmem_limit),
        ),
    )(z, z)

    # tiny final reduction over per-row losses (padded rows are exactly 0)
    return jnp.sum(per_row) / (2 * B)


def ntxent_loss_ref(z_i, z_j, temperature=TEMPERATURE):
    """Pure-JAX f32 reference mirroring the PyTorch module."""
    zi = z_i / jnp.maximum(jnp.linalg.norm(z_i, axis=1, keepdims=True), EPS)
    zj = z_j / jnp.maximum(jnp.linalg.norm(z_j, axis=1, keepdims=True), EPS)
    z = jnp.concatenate([zi, zj], axis=0)
    N = z.shape[0]
    B = N // 2
    sim = z @ z.T / temperature
    sim = jnp.where(jnp.eye(N, dtype=bool), -jnp.inf, sim)
    labels = jnp.concatenate([jnp.arange(B, 2 * B), jnp.arange(0, B)])
    logp = sim - jax.scipy.special.logsumexp(sim, axis=1, keepdims=True)
    return -jnp.mean(logp[jnp.arange(N), labels])


if __name__ == "__main__":
    key = jax.random.PRNGKey(0)

    # small shapes consistent with the module's forward (B, D) projections;
    # cases chosen to exercise both the resident-k and streamed-k code paths
    # and multi-tile partner offsets.
    cases = [
        dict(B=8, D=32),                           # resident k, blk=128, num_q=2
        dict(B=300, D=72),                         # resident k, blk=384
        dict(B=300, D=72, k_resident=False),       # streamed-k path
        dict(B=260, D=40, block=128),              # resident k, num_q=6 (dyn. slices)
    ]
    for c in cases:
        B, D = c["B"], c["D"]
        key, k1, k2 = jax.random.split(key, 3)
        z_i = jax.random.normal(k1, (B, D), dtype=jnp.float32)
        z_j = jax.random.normal(k2, (B, D), dtype=jnp.float32)
        kwargs = {k: v for k, v in c.items() if k not in ("B", "D")}

        loss = jax.block_until_ready(ntxent_loss(z_i, z_j, **kwargs))
        ref = jax.block_until_ready(ntxent_loss_ref(z_i, z_j))
        # bf16 MXU logits -> relaxed tolerance vs the f32 reference
        assert jnp.allclose(loss, ref, rtol=2e-2, atol=2e-2), (c, loss, ref)

    print("KERNEL_OK")
</pallas_src>

<mosaic_0001>
module attributes {stable_mosaic.version = 11 : i64} {
  func.func @kernel(%arg0: i32, %arg1: i32, %arg2: memref<128x128xbf16, #tpu.memory_space<vmem>>, %arg3: memref<256x128xbf16, #tpu.memory_space<vmem>>, %arg4: memref<128x1xf32, #tpu.memory_space<vmem>>, %arg5: memref<128x1xf32, #tpu.memory_space<vmem>>, %arg6: memref<128x1xf32, #tpu.memory_space<vmem>>, %arg7: memref<128x1xf32, #tpu.memory_space<vmem>>) attributes {dimension_semantics = [#tpu.dimension_semantics<parallel>, #tpu.dimension_semantics<arbitrary>], iteration_bounds = array<i64: 2, 2>, scalar_prefetch = 0 : i64, scratch_operands = 3 : i64, tpu.core_type = #tpu.core_type<tc>, window_params = [{transform_indices = @transform_0, window_bounds = array<i64: 128, 128>}, {pipeline_mode = #tpu.pipeline_mode<synchronous>, transform_indices = @transform_1, window_bounds = array<i64: 256, 128>}, {transform_indices = @transform_2, window_bounds = array<i64: 128, 1>}]} {
    %c0_i32 = arith.constant 0 : i32
    %0 = arith.cmpi eq, %arg1, %c0_i32 : i32
    %1 = arith.extui %0 : i1 to i32
    %c0_i32_0 = arith.constant 0 : i32
    %2 = arith.cmpi ne, %1, %c0_i32_0 : i32
    scf.if %2 {
      %cst_31 = arith.constant -1.000000e+30 : f32
      %77 = vector.broadcast %cst_31 : f32 to vector<128x1xf32>
      %c0_32 = arith.constant 0 : index
      %c0_33 = arith.constant 0 : index
      %78 = vector.load %arg5[%c0_32, %c0_33] : memref<128x1xf32, #tpu.memory_space<vmem>>, vector<128x1xf32>
      tpu.vector_store %arg5[%c0_32, %c0_33], %77 {strides = array<i32>} : memref<128x1xf32, #tpu.memory_space<vmem>>, vector<128x1xf32>,
      %cst_34 = arith.constant 0.000000e+00 : f32
      %79 = vector.broadcast %cst_34 : f32 to vector<128x1xf32>
      %c0_35 = arith.constant 0 : index
      %c0_36 = arith.constant 0 : index
      %80 = vector.load %arg6[%c0_35, %c0_36] : memref<128x1xf32, #tpu.memory_space<vmem>>, vector<128x1xf32>
      tpu.vector_store %arg6[%c0_35, %c0_36], %79 {strides = array<i32>} : memref<128x1xf32, #tpu.memory_space<vmem>>, vector<128x1xf32>,
    } else {
    }
    %c0 = arith.constant 0 : index
    %c0_1 = arith.constant 0 : index
    %3 = vector.load %arg2[%c0, %c0_1] : memref<128x128xbf16, #tpu.memory_space<vmem>>, vector<128x128xbf16>
    %c128_i32 = arith.constant 128 : i32
    %4 = arith.muli %arg1, %c128_i32 : i32
    %5 = tpu.assume_multiple %4, 128 : i32
    %6 = arith.index_cast %5 : i32 to index
    %c0_2 = arith.constant 0 : index
    %7 = vector.load %arg3[%6, %c0_2] : memref<256x128xbf16, #tpu.memory_space<vmem>>, vector<128x128xbf16>
    %cst = arith.constant dense<0.000000e+00> : vector<128x128xf32>
    %8 = tpu.matmul %3, %7, %cst {dimension_numbers = #tpu.dot_dimension_numbers<[1], [1], [0], [0], [0, 0, 1, 0], [], []>} : vector<128x128xbf16>, vector<128x128xbf16>, vector<128x128xf32> -> vector<128x128xf32>
    %cst_3 = arith.constant 2.000000e+00 : f32
    %9 = vector.broadcast %cst_3 : f32 to vector<128x128xf32>
    %10 = arith.mulf %8, %9 : vector<128x128xf32>
    %11 = tpu.iota {dimensions = array<i32: 0>} : vector<128x1xi32>
    %12 = tpu.iota {dimensions = array<i32: 1>} : vector<1x128xi32>
    %c128_i32_4 = arith.constant 128 : i32
    %13 = arith.muli %arg0, %c128_i32_4 : i32
    %14 = vector.broadcast %13 : i32 to vector<128x1xi32>
    %15 = arith.addi %14, %11 : vector<128x1xi32>
    %c128_i32_5 = arith.constant 128 : i32
    %16 = arith.muli %arg1, %c128_i32_5 : i32
    %17 = vector.broadcast %16 : i32 to vector<1x128xi32>
    %18 = arith.addi %17, %12 : vector<1x128xi32>
    %c1_i32 = arith.constant 1 : i32
    %19 = arith.addi %arg0, %c1_i32 : i32
    %c2_i32 = arith.constant 2 : i32
    %c0_i32_6 = arith.constant 0 : i32
    %20 = arith.cmpi eq, %c2_i32, %c0_i32_6 : i32
    %c1_i32_7 = arith.constant 1 : i32
    %21 = arith.select %20, %c1_i32_7, %c2_i32 : i32
    %22 = arith.remsi %19, %21 : i32
    %c0_i32_8 = arith.constant 0 : i32
    %23 = arith.cmpi ne, %22, %c0_i32_8 : i32
    %c0_i32_9 = arith.constant 0 : i32
    %24 = arith.cmpi slt, %22, %c0_i32_9 : i32
    %c0_i32_10 = arith.constant 0 : i32
    %25 = arith.cmpi slt, %21, %c0_i32_10 : i32
    %26 = arith.xori %24, %25 : i1
    %27 = arith.andi %26, %23 : i1
    %28 = arith.addi %22, %21 : i32
    %29 = arith.select %27, %28, %22 : i32
    %30 = arith.cmpi eq, %arg1, %29 : i32
    %31 = arith.extui %30 : i1 to i32
    %c0_i32_11 = arith.constant 0 : i32
    %32 = arith.cmpi ne, %31, %c0_i32_11 : i32
    scf.if %32 {
      %77 = vector.broadcast %11 : vector<128x1xi32> to vector<128x128xi32>
      %78 = vector.broadcast %12 : vector<1x128xi32> to vector<128x128xi32>
      %79 = arith.cmpi eq, %77, %78 : vector<128x128xi32>
      %cst_31 = arith.constant 0.000000e+00 : f32
      %80 = vector.broadcast %cst_31 : f32 to vector<128x128xf32>
      %81 = arith.select %79, %10, %80 : vector<128x128xi1>, vector<128x128xf32>
      %cst_32 = arith.constant dense<0.000000e+00> : vector<128xf32>
      %82 = vector.multi_reduction <add>, %81, %cst_32 [1] : vector<128x128xf32> to vector<128xf32>
      %83 = vector.shape_cast %82 : vector<128xf32> to vector<128x1xf32>
      %c0_33 = arith.constant 0 : index
      %c0_34 = arith.constant 0 : index
      %84 = vector.load %arg7[%c0_33, %c0_34] : memref<128x1xf32, #tpu.memory_space<vmem>>, vector<128x1xf32>
      tpu.vector_store %arg7[%c0_33, %c0_34], %83 {strides = array<i32>} : memref<128x1xf32, #tpu.memory_space<vmem>>, vector<128x1xf32>,
    } else {
    }
    %c128_i32_12 = arith.constant 128 : i32
    %c0_i32_13 = arith.constant 0 : i32
    %33 = arith.cmpi eq, %c128_i32_12, %c0_i32_13 : i32
    %c1_i32_14 = arith.constant 1 : i32
    %34 = arith.select %33, %c1_i32_14, %c128_i32_12 : i32
    %35 = vector.broadcast %34 : i32 to vector<1x128xi32>
    %36 = arith.remsi %18, %35 : vector<1x128xi32>
    %c0_i32_15 = arith.constant 0 : i32
    %37 = vector.broadcast %c0_i32_15 : i32 to vector<1x128xi32>
    %38 = arith.cmpi ne, %36, %37 : vector<1x128xi32>
    %c0_i32_16 = arith.constant 0 : i32
    %39 = vector.broadcast %c0_i32_16 : i32 to vector<1x128xi32>
    %40 = arith.cmpi slt, %36, %39 : vector<1x128xi32>
    %c0_i32_17 = arith.constant 0 : i32
    %41 = arith.cmpi slt, %34, %c0_i32_17 : i32
    %42 = vector.broadcast %41 : i1 to vector<1x128xi1>
    %43 = vector.broadcast %42 : vector<1x128xi1> to vector<1x128xi1>
    %44 = arith.xori %40, %43 : vector<1x128xi1>
    %45 = arith.andi %44, %38 : vector<1x128xi1>
    %46 = vector.broadcast %34 : i32 to vector<1x128xi32>
    %47 = arith.addi %36, %46 : vector<1x128xi32>
    %48 = arith.select %45, %47, %36 : vector<1x128xi1>, vector<1x128xi32>
    %c8_i32 = arith.constant 8 : i32
    %49 = vector.broadcast %c8_i32 : i32 to vector<1x128xi32>
    %50 = arith.cmpi sge, %48, %49 : vector<1x128xi32>
    %51 = vector.broadcast %15 : vector<128x1xi32> to vector<128x128xi32>
    %52 = vector.broadcast %18 : vector<1x128xi32> to vector<128x128xi32>
    %53 = arith.cmpi eq, %51, %52 : vector<128x128xi32>
    %54 = vector.broadcast %50 : vector<1x128xi1> to vector<128x128xi1>
    %55 = arith.ori %53, %54 : vector<128x128xi1>
    %cst_18 = arith.constant -1.000000e+30 : f32
    %56 = vector.broadcast %cst_18 : f32 to vector<128x128xf32>
    %57 = arith.select %55, %56, %10 : vector<128x128xi1>, vector<128x128xf32>
    %c0_19 = arith.constant 0 : index
    %c0_20 = arith.constant 0 : index
    %58 = vector.load %arg5[%c0_19, %c0_20] : memref<128x1xf32, #tpu.memory_space<vmem>>, vector<128x1xf32>
    %cst_21 = arith.constant dense<0xFF800000> : vector<128xf32>
    %59 = vector.multi_reduction <maximumf>, %57, %cst_21 [1] : vector<128x128xf32> to vector<128xf32>
    %60 = vector.shape_cast %59 : vector<128xf32> to vector<128x1xf32>
    %61 = arith.maximumf %58, %60 : vector<128x1xf32>
    %62 = vector.broadcast %61 : vector<128x1xf32> to vector<128x128xf32>
    %63 = arith.subf %57, %62 : vector<128x128xf32>
    %64 = math.exp %63 : vector<128x128xf32>
    %65 = arith.subf %58, %61 : vector<128x1xf32>
    %66 = math.exp %65 : vector<128x1xf32>
    %c0_22 = arith.constant 0 : index
    %c0_23 = arith.constant 0 : index
    %67 = vector.load %arg6[%c0_22, %c0_23] : memref<128x1xf32, #tpu.memory_space<vmem>>, vector<128x1xf32>
    %68 = arith.mulf %66, %67 : vector<128x1xf32>
    %cst_24 = arith.constant dense<0.000000e+00> : vector<128xf32>
    %69 = vector.multi_reduction <add>, %64, %cst_24 [1] : vector<128x128xf32> to vector<128xf32>
    %70 = vector.shape_cast %69 : vector<128xf32> to vector<128x1xf32>
    %71 = arith.addf %68, %70 : vector<128x1xf32>
    %c0_25 = arith.constant 0 : index
    %c0_26 = arith.constant 0 : index
    %72 = vector.load %arg6[%c0_25, %c0_26] : memref<128x1xf32, #tpu.memory_space<vmem>>, vector<128x1xf32>
    tpu.vector_store %arg6[%c0_25, %c0_26], %71 {strides = array<i32>} : memref<128x1xf32, #tpu.memory_space<vmem>>, vector<128x1xf32>,
    %c0_27 = arith.constant 0 : index
    %c0_28 = arith.constant 0 : index
    %73 = vector.load %arg5[%c0_27, %c0_28] : memref<128x1xf32, #tpu.memory_space<vmem>>, vector<128x1xf32>
    tpu.vector_store %arg5[%c0_27, %c0_28], %61 {strides = array<i32>} : memref<128x1xf32, #tpu.memory_space<vmem>>, vector<128x1xf32>,
    %c1_i32_29 = arith.constant 1 : i32
    %74 = arith.cmpi eq, %arg1, %c1_i32_29 : i32
    %75 = arith.extui %74 : i1 to i32
    %c0_i32_30 = arith.constant 0 : i32
    %76 = arith.cmpi ne, %75, %c0_i32_30 : i32
    scf.if %76 {
      %c0_31 = arith.constant 0 : index
      %c0_32 = arith.constant 0 : index
      %77 = vector.load %arg5[%c0_31, %c0_32] : memref<128x1xf32, #tpu.memory_space<vmem>>, vector<128x1xf32>
      %c0_33 = arith.constant 0 : index
      %c0_34 = arith.constant 0 : index
      %78 = vector.load %arg6[%c0_33, %c0_34] : memref<128x1xf32, #tpu.memory_space<vmem>>, vector<128x1xf32>
      %79 = math.log %78 : vector<128x1xf32>
      %80 = arith.addf %77, %79 : vector<128x1xf32>
      %c128_i32_35 = arith.constant 128 : i32
      %c0_i32_36 = arith.constant 0 : i32
      %81 = arith.cmpi eq, %c128_i32_35, %c0_i32_36 : i32
      %c1_i32_37 = arith.constant 1 : i32
      %82 = arith.select %81, %c1_i32_37, %c128_i32_35 : i32
      %83 = vector.broadcast %82 : i32 to vector<128x1xi32>
      %84 = arith.remsi %15, %83 : vector<128x1xi32>
      %c0_i32_38 = arith.constant 0 : i32
      %85 = vector.broadcast %c0_i32_38 : i32 to vector<128x1xi32>
      %86 = arith.cmpi ne, %84, %85 : vector<128x1xi32>
      %c0_i32_39 = arith.constant 0 : i32
      %87 = vector.broadcast %c0_i32_39 : i32 to vector<128x1xi32>
      %88 = arith.cmpi slt, %84, %87 : vector<128x1xi32>
      %c0_i32_40 = arith.constant 0 : i32
      %89 = arith.cmpi slt, %82, %c0_i32_40 : i32
      %90 = vector.broadcast %89 : i1 to vector<128x1xi1>
      %91 = vector.broadcast %90 : vector<128x1xi1> to vector<128x1xi1>
      %92 = arith.xori %88, %91 : vector<128x1xi1>
      %93 = arith.andi %92, %86 : vector<128x1xi1>
      %94 = vector.broadcast %82 : i32 to vector<128x1xi32>
      %95 = arith.addi %84, %94 : vector<128x1xi32>
      %96 = arith.select %93, %95, %84 : vector<128x1xi1>, vector<128x1xi32>
      %c8_i32_41 = arith.constant 8 : i32
      %97 = vector.broadcast %c8_i32_41 : i32 to vector<128x1xi32>
      %98 = arith.cmpi slt, %96, %97 : vector<128x1xi32>
      %c0_42 = arith.constant 0 : index
      %c0_43 = arith.constant 0 : index
      %99 = vector.load %arg7[%c0_42, %c0_43] : memref<128x1xf32, #tpu.memory_space<vmem>>, vector<128x1xf32>
      %100 = arith.subf %80, %99 : vector<128x1xf32>
      %cst_44 = arith.constant 0.000000e+00 : f32
      %101 = vector.broadcast %cst_44 : f32 to vector<128x1xf32>
      %102 = arith.select %98, %100, %101 : vector<128x1xi1>, vector<128x1xf32>
      %c0_45 = arith.constant 0 : index
      %c0_46 = arith.constant 0 : index
      %103 = vector.load %arg4[%c0_45, %c0_46] : memref<128x1xf32, #tpu.memory_space<vmem>>, vector<128x1xf32>
      tpu.vector_store %arg4[%c0_45, %c0_46], %102 {strides = array<i32>} : memref<128x1xf32, #tpu.memory_space<vmem>>, vector<128x1xf32>,
    } else {
    }
    return
  }
  func.func @transform_0(%arg0: i32, %arg1: i32) -> (i32, i32) {
    %c0_i32 = arith.constant 0 : i32
    %c0_i32_0 = arith.constant 0 : i32
    return %arg0, %c0_i32 : i32, i32
  }
  func.func @transform_1(%arg0: i32, %arg1: i32) -> (i32, i32) {
    %c0_i32 = arith.constant 0 : i32
    %c0_i32_0 = arith.constant 0 : i32
    %c0_i32_1 = arith.constant 0 : i32
    return %c0_i32, %c0_i32_0 : i32, i32
  }
  func.func @transform_2(%arg0: i32, %arg1: i32) -> (i32, i32) {
    %c0_i32 = arith.constant 0 : i32
    %c0_i32_0 = arith.constant 0 : i32
    return %arg0, %c0_i32 : i32, i32
  }
}

</mosaic_0001>

<llo_original>
// kernel: tpu_custom_call.1
$region0: #{tpu_custom_call.1}
  #allocation0 [shape = 'u32[]', space=smem, size = 0x4, offset = 0x4, fixed_abs, tag = 'smem constant byte address 0x4 - core index']
  #allocation1 [shape = 'u32[144,128]{1,0:T(1,128)}', space=vmem, size = 0x12000, scoped, tag = 'internal scratch']
  #allocation2 [shape = 'f32[128,1]{1,0:T(8,128)}', space=vmem, size = 0x10000, scoped, tag = 'scratch operand']
  #allocation3 [shape = 'f32[128,1]{1,0:T(8,128)}', space=vmem, size = 0x10000, scoped, tag = 'scratch operand']
  #allocation4 [shape = 'f32[128,1]{1,0:T(8,128)}', space=vmem, size = 0x10000, scoped, tag = 'scratch operand']
  %s0 = inlined_call_operand.hbm [shape: bf16[256,128], index: 0, kind: input, shape index: {}]
  %s1 = inlined_call_operand.hbm [shape: bf16[256,128], index: 1, kind: input, shape index: {}]
  %s2 = inlined_call_operand.vmem [shape: f32[256,1], index: 2, kind: output, shape index: {}]
  %s3 = sld [smem:[#allocation0]]
  $region61: #{tpu_custom_call.1} parent=0
    _
  %s5 = ssub.s32 1, %s3
  %s6 = scalar_select 0, %s5, %s3
  $region1: #{tpu_custom_call.1} parent=0
    #allocation5 [shape = 'u8[65536]{0}', space=vmem, size = 0x10000, scoped, tag = 'input window, operand 0']
    #allocation6 [shape = 's32[2]{0}', space=sflag, size = 0x8, scoped, tag = 'scoped memory for tpu_custom_call.1']
    #allocation7 [shape = 'u8[65536]{0}', space=vmem, size = 0x10000, scoped, tag = 'input window, operand 1, single buffered']
    #allocation8 [shape = 's32[1]{0}', space=sflag, size = 0x4, scoped, tag = 'scoped memory for tpu_custom_call.1']
    %7 = vsyncpa [#allocation6], 0
    %s8 = scalar_lea.sflag [#allocation6], 1
    %9 = vsyncpa %s8, 0
    %10 = vsyncpa [#allocation8], 0
    loop: start=0, step=1, limit=6
    $region2: #{tpu_custom_call.1} parent=1 // loop_pre_header
      _
    $region3: #{tpu_custom_call.1} parent=1 // loop_header
      %s12 = sphi 0, %s16
      %p13 = scmp.ge.s32.totalorder %s12, 6
      %s19 = sphi 0, %s31
      %s20 = sphi 0, %s27
      %s21 = sphi 0, %s19
      %s22 = sphi 0, %s20
      %s23 = sphi 0, %s21
      %s24 = sphi 0, %s22
      %s34 = sphi 0, %s36
      %s37 = sphi 0, %s34
      %s38 = sphi 0, %s37
      %s54 = sphi 0, %s38
      %s58 = sphi 0, %s58
      %s60 = sphi 0, %s58
      %s61 = sphi 0, %s60
      %s75 = sphi 0, %s61
      %s81 = sphi 0, %s83
      %s84 = sphi 0, %s81
      %s85 = sphi 0, %s84
      %s101 = sphi 0, %s85
    $region4: #{tpu_custom_call.1} parent=1 // loop_header_branch
      %15 = sbr.rel (%p13) target = $region8
    $region5: #{tpu_custom_call.1} parent=1 // loop_body
      %s17 = ssub.s32 %s12, 1
      %s18 = ssub.s32 %s12, 2
      %s25 = sadd.s32 1, %s20
      %p26 = scmp.ge.s32.totalorder %s25, 2
      %s27 = scalar_select %p26, 0, %s25
      %s28 = sadd.s32 1, %s19
      %s29 = scalar_select %p26, %s28, %s19
      %p30 = scmp.ge.s32.totalorder %s29, 2
      %s31 = scalar_select %p30, 0, %s29
      %s32 = ssub.s32 %s19, %s31
      %p33 = scmp.eq.s32.totalorder %s32, 0
      %s35 = sadd.s32 %s34, 1
      %s36 = scalar_select %p33, %s34, %s35
      %p39 = pneg %p33
      %p40 = scmp.eq.s32.totalorder %s12, 3
      %p41 = por %p39, %p40
      %p42 = scmp.ne.s32.totalorder %s34, %s37
      %p43 = scmp.eq.s32.totalorder %s12, 0
      %p44 = por %p42, %p43
      %p45 = scmp.ne.s32.totalorder %s34, %s37
      %p46 = scmp.eq.s32.totalorder %s17, 3
      %p47 = por %p45, %p46
      %p48 = scmp.ne.s32.totalorder %s37, %s38
      %p49 = scmp.eq.s32.totalorder %s17, 0
      %p50 = por %p48, %p49
      %p51 = scmp.ne.s32.totalorder %s37, %s38
      %p52 = scmp.eq.s32.totalorder %s18, 3
      %p53 = por %p51, %p52
      %p55 = scmp.ne.s32.totalorder %s38, %s54
      %p56 = scmp.eq.s32.totalorder %s18, 0
      %p57 = por %p55, %p56
      %s59 = sadd.s32 %s58, 1
      %p62 = scmp.eq.s32.totalorder %s12, 3
      %p63 = scmp.ne.s32.totalorder %s58, %s60
      %p64 = scmp.eq.s32.totalorder %s12, 0
      %p65 = por %p63, %p64
      %p66 = scmp.ne.s32.totalorder %s58, %s60
      %p67 = scmp.eq.s32.totalorder %s17, 3
      %p68 = por %p66, %p67
      %p69 = scmp.ne.s32.totalorder %s60, %s61
      %p70 = scmp.eq.s32.totalorder %s17, 0
      %p71 = por %p69, %p70
      %p72 = scmp.ne.s32.totalorder %s60, %s61
      %p73 = scmp.eq.s32.totalorder %s18, 3
      %p74 = por %p72, %p73
      %p76 = scmp.ne.s32.totalorder %s61, %s75
      %p77 = scmp.eq.s32.totalorder %s18, 0
      %p78 = por %p76, %p77
      %s79 = ssub.s32 %s19, %s31
      %p80 = scmp.eq.s32.totalorder %s79, 0
      %s82 = sadd.s32 %s81, 1
      %s83 = scalar_select %p80, %s81, %s82
      %p86 = pneg %p80
      %p87 = scmp.eq.s32.totalorder %s12, 3
      %p88 = por %p86, %p87
      %p89 = scmp.ne.s32.totalorder %s81, %s84
      %p90 = scmp.eq.s32.totalorder %s12, 0
      %p91 = por %p89, %p90
      %p92 = scmp.ne.s32.totalorder %s81, %s84
      %p93 = scmp.eq.s32.totalorder %s17, 3
      %p94 = por %p92, %p93
      %p95 = scmp.ne.s32.totalorder %s84, %s85
      %p96 = scmp.eq.s32.totalorder %s17, 0
      %p97 = por %p95, %p96
      %p98 = scmp.ne.s32.totalorder %s84, %s85
      %p99 = scmp.eq.s32.totalorder %s18, 3
      %p100 = por %p98, %p99
      %p102 = scmp.ne.s32.totalorder %s85, %s101
      %p103 = scmp.eq.s32.totalorder %s18, 0
      %p104 = por %p102, %p103
      %p105 = scmp.le.s32.totalorder 1, %s12
      %p106 = scmp.lt.s32.totalorder %s12, 5
      %p107 = pnand %p105, %p106
      %p108 = pneg %p107
      // Predicated region
      $region9: #{tpu_custom_call.1} parent=5 // pred_check
        _
      $region10: #{tpu_custom_call.1} parent=5 // pred_check_branch
        %110 = sbr.rel (%p107) target = $region12
      $region11: #{tpu_custom_call.1} parent=5 // pred_region
        %s111 = ssub.s32 %s12, 1
        // Predicated region
        $region13: #{tpu_custom_call.1} parent=11 // pred_check
          %p112 = pneg %p71
        $region14: #{tpu_custom_call.1} parent=11 // pred_check_branch
          %114 = sbr.rel (%p112) target = $region16
        $region15: #{tpu_custom_call.1} parent=11 // pred_region
          %s116 = ssub.s32 2048, 2048
          %117 = vsyncadd [#allocation8], %s116
          %s118 = sshll.u32 [#allocation7], 4
          %s119 = int_to_ptr.vmem [resolvable:$true] %s118
          %124 = dma.hbm_to_vmem [thread:$0]  %s1, 2048, %s119, [#allocation8], 64, 64, 4
        $region16: #{tpu_custom_call.1} parent=11 // pred_fallthru
          _
      $region12: #{tpu_custom_call.1} parent=5 // pred_fallthru
        _
      %p125 = scmp.lt.s32.totalorder %s12, 4
      // Predicated region
      $region17: #{tpu_custom_call.1} parent=5 // pred_check
        %p126 = pneg %p125
      $region18: #{tpu_custom_call.1} parent=5 // pred_check_branch
        %128 = sbr.rel (%p126) target = $region20
      $region19: #{tpu_custom_call.1} parent=5 // pred_region
        // Predicated region
        $region21: #{tpu_custom_call.1} parent=19 // pred_check
          %p129 = pneg %p44
        $region22: #{tpu_custom_call.1} parent=19 // pred_check_branch
          %131 = sbr.rel (%p129) target = $region24
        $region23: #{tpu_custom_call.1} parent=19 // pred_region
          %s132 = sand.u32 %s34, 1
          %s133 = scalar_lea.sflag [#allocation6], %s132
          %s134 = sand.u32 %s34, 1
          %s135 = smul.addr %s134, 64
          %s136 = scalar_lea.vmem [#allocation5], %s135
          %s137 = smul.u32 16, %s19
          %s139 = ssub.s32 1024, 1024
          %140 = vsyncadd %s133, %s139
          %s141 = smul.addr %s137, 64
          %s142 = scalar_lea.hbm %s0, %s141
          %s143 = sshll.u32 %s136, 4
          %s144 = int_to_ptr.vmem [resolvable:$true] %s143
          %149 = dma.hbm_to_vmem [thread:$0]  %s142, 1024, %s144, %s133, 64, 64, 4
        $region24: #{tpu_custom_call.1} parent=19 // pred_fallthru
          _
      $region20: #{tpu_custom_call.1} parent=5 // pred_fallthru
        _
      %p150 = scmp.le.s32.totalorder 1, %s12
      %p151 = scmp.lt.s32.totalorder %s12, 5
      %p152 = pnand %p150, %p151
      %p153 = pneg %p152
      // Predicated region
      $region25: #{tpu_custom_call.1} parent=5 // pred_check
        _
      $region26: #{tpu_custom_call.1} parent=5 // pred_check_branch
        %155 = sbr.rel (%p152) target = $region28
      $region27: #{tpu_custom_call.1} parent=5 // pred_region
        %s156 = ssub.s32 %s12, 1
        %s157 = sand.u32 %s37, 1
        %s158 = scalar_lea.sflag [#allocation6], %s157
        %s159 = sand.u32 %s37, 1
        %s160 = smul.addr %s159, 64
        %s161 = scalar_lea.vmem [#allocation5], %s160
        // Predicated region
        $region29: #{tpu_custom_call.1} parent=27 // pred_check
          %p162 = pneg %p50
        $region30: #{tpu_custom_call.1} parent=27 // pred_check_branch
          %164 = sbr.rel (%p162) target = $region32
        $region31: #{tpu_custom_call.1} parent=27 // pred_region
          %165 = dma.done %s158, 1024
        $region32: #{tpu_custom_call.1} parent=27 // pred_fallthru
          _
        // Predicated region
        $region33: #{tpu_custom_call.1} parent=27 // pred_check
          %p166 = pneg %p71
        $region34: #{tpu_custom_call.1} parent=27 // pred_check_branch
          %168 = sbr.rel (%p166) target = $region36
        $region35: #{tpu_custom_call.1} parent=27 // pred_region
          %169 = dma.done [#allocation8], 2048
        $region36: #{tpu_custom_call.1} parent=27 // pred_fallthru
          _
        %s170 = sand.u32 %s37, 1
        %s171 = scalar_lea.sflag [#allocation6], %s170
        %s172 = sand.u32 %s37, 1
        %s173 = smul.addr %s172, 64
        %s174 = scalar_lea.vmem [#allocation5], %s173
        %p175 = pneg %p50
        %p176 = pneg %p47
        %p177 = pneg %p71
        %p178 = pneg %p68
        %p179 = pneg %p97
        %p180 = pneg %p94
        %s181 = smul.u32 16, %s21
        %p182 = scmp.lt.s32.totalorder %s181, 31
        %s183 = scalar_select %p182, %s181, 31
        %s184 = smul.addr %s183, 8
        %s185 = scalar_lea.vmem %s2, %s184
        %s186 = smul.u32 16, %s21
        %s187 = smul.u32 16, %s21
        %p188 = scmp.lt.s32.totalorder %s187, 31
        %s189 = scalar_select %p188, %s187, 31
        %s190 = smul.addr %s189, 8
        %s191 = scalar_lea.vmem %s2, %s190
        %s192 = smul.u32 16, %s21
        %p194 = scmp.eq.s32.totalorder %s22, 0
        // Predicated region
        $region37: #{tpu_custom_call.1} parent=27 // pred_check
          %p195 = pneg %p194
        $region38: #{tpu_custom_call.1} parent=27 // pred_check_branch
          %197 = sbr.rel (%p195) target = $region40
        $region39: #{tpu_custom_call.1} parent=27 // pred_region
          %vm198 = vcmask 7168
          %199 = vst.msk [vmem:[#allocation2] sm:$0xff] %vm198, -1e+30
          %200 = vst.msk [vmem:[#allocation2 + $0x8] sm:$0xff] %vm198, -1e+30
          %201 = vst.msk [vmem:[#allocation2 + $0x10] sm:$0xff] %vm198, -1e+30
          %202 = vst.msk [vmem:[#allocation2 + $0x18] sm:$0xff] %vm198, -1e+30
          %203 = vst.msk [vmem:[#allocation2 + $0x20] sm:$0xff] %vm198, -1e+30
          %204 = vst.msk [vmem:[#allocation2 + $0x28] sm:$0xff] %vm198, -1e+30
          %205 = vst.msk [vmem:[#allocation2 + $0x30] sm:$0xff] %vm198, -1e+30
          %206 = vst.msk [vmem:[#allocation2 + $0x38] sm:$0xff] %vm198, -1e+30
          %207 = vst.msk [vmem:[#allocation2 + $0x40] sm:$0xff] %vm198, -1e+30
          %208 = vst.msk [vmem:[#allocation2 + $0x48] sm:$0xff] %vm198, -1e+30
          %209 = vst.msk [vmem:[#allocation2 + $0x50] sm:$0xff] %vm198, -1e+30
          %210 = vst.msk [vmem:[#allocation2 + $0x58] sm:$0xff] %vm198, -1e+30
          %211 = vst.msk [vmem:[#allocation2 + $0x60] sm:$0xff] %vm198, -1e+30
          %212 = vst.msk [vmem:[#allocation2 + $0x68] sm:$0xff] %vm198, -1e+30
          %213 = vst.msk [vmem:[#allocation2 + $0x70] sm:$0xff] %vm198, -1e+30
          %214 = vst.msk [vmem:[#allocation2 + $0x78] sm:$0xff] %vm198, -1e+30
          %215 = vst.msk [vmem:[#allocation3] sm:$0xff] %vm198, 0.0
          %216 = vst.msk [vmem:[#allocation3 + $0x8] sm:$0xff] %vm198, 0.0
          %217 = vst.msk [vmem:[#allocation3 + $0x10] sm:$0xff] %vm198, 0.0
          %218 = vst.msk [vmem:[#allocation3 + $0x18] sm:$0xff] %vm198, 0.0
          %219 = vst.msk [vmem:[#allocation3 + $0x20] sm:$0xff] %vm198, 0.0
          %220 = vst.msk [vmem:[#allocation3 + $0x28] sm:$0xff] %vm198, 0.0
          %221 = vst.msk [vmem:[#allocation3 + $0x30] sm:$0xff] %vm198, 0.0
          %222 = vst.msk [vmem:[#allocation3 + $0x38] sm:$0xff] %vm198, 0.0
          %223 = vst.msk [vmem:[#allocation3 + $0x40] sm:$0xff] %vm198, 0.0
          %224 = vst.msk [vmem:[#allocation3 + $0x48] sm:$0xff] %vm198, 0.0
          %225 = vst.msk [vmem:[#allocation3 + $0x50] sm:$0xff] %vm198, 0.0
          %226 = vst.msk [vmem:[#allocation3 + $0x58] sm:$0xff] %vm198, 0.0
          %227 = vst.msk [vmem:[#allocation3 + $0x60] sm:$0xff] %vm198, 0.0
          %228 = vst.msk [vmem:[#allocation3 + $0x68] sm:$0xff] %vm198, 0.0
          %229 = vst.msk [vmem:[#allocation3 + $0x70] sm:$0xff] %vm198, 0.0
          %230 = vst.msk [vmem:[#allocation3 + $0x78] sm:$0xff] %vm198, 0.0
        $region40: #{tpu_custom_call.1} parent=27 // pred_fallthru
          _
        %v231 = vld [vmem:[%s161] sm:$0xf]
        %v232 = vld [vmem:[%s161 + $0x4] sm:$0xf]
        %v233 = vld [vmem:[%s161 + $0x8] sm:$0xf]
        %v234 = vld [vmem:[%s161 + $0xc] sm:$0xf]
        %v235 = vld [vmem:[%s161 + $0x10] sm:$0xf]
        %v236 = vld [vmem:[%s161 + $0x14] sm:$0xf]
        %v237 = vld [vmem:[%s161 + $0x18] sm:$0xf]
        %v238 = vld [vmem:[%s161 + $0x1c] sm:$0xf]
        %v239 = vld [vmem:[%s161 + $0x20] sm:$0xf]
        %v240 = vld [vmem:[%s161 + $0x24] sm:$0xf]
        %v241 = vld [vmem:[%s161 + $0x28] sm:$0xf]
        %v242 = vld [vmem:[%s161 + $0x2c] sm:$0xf]
        %v243 = vld [vmem:[%s161 + $0x30] sm:$0xf]
        %v244 = vld [vmem:[%s161 + $0x34] sm:$0xf]
        %v245 = vld [vmem:[%s161 + $0x38] sm:$0xf]
        %v246 = vld [vmem:[%s161 + $0x3c] sm:$0xf]
        %s247 = smul.u32 %s22, 128
        %s248 = sshra.s32 %s247, 3
        %s249 = sand.u32 %s247, 7
        %s250 = smul.addr %s248, 4
        %s251 = scalar_lea.vmem [#allocation7], %s250
        %v252 = vld [vmem:[%s251] sm:$0xf]
        %v253 = vld [vmem:[%s251 + $0x4] sm:$0xf]
        %v254 = vld [vmem:[%s251 + $0x8] sm:$0xf]
        %v255 = vld [vmem:[%s251 + $0xc] sm:$0xf]
        %v256 = vld [vmem:[%s251 + $0x10] sm:$0xf]
        %v257 = vld [vmem:[%s251 + $0x14] sm:$0xf]
        %v258 = vld [vmem:[%s251 + $0x18] sm:$0xf]
        %v259 = vld [vmem:[%s251 + $0x1c] sm:$0xf]
        %v260 = vld [vmem:[%s251 + $0x20] sm:$0xf]
        %v261 = vld [vmem:[%s251 + $0x24] sm:$0xf]
        %v262 = vld [vmem:[%s251 + $0x28] sm:$0xf]
        %v263 = vld [vmem:[%s251 + $0x2c] sm:$0xf]
        %v264 = vld [vmem:[%s251 + $0x30] sm:$0xf]
        %v265 = vld [vmem:[%s251 + $0x34] sm:$0xf]
        %v266 = vld [vmem:[%s251 + $0x38] sm:$0xf]
        %v267 = vld [vmem:[%s251 + $0x3c] sm:$0xf]
        %v284 = vunpack.c.l.b16 %v231
        %v285 = vunpack.c.l.b16 %v232
        %v286 = vunpack.c.l.b16 %v233
        %v287 = vunpack.c.l.b16 %v234
        %v288 = vunpack.c.l.b16 %v235
        %v289 = vunpack.c.l.b16 %v236
        %v290 = vunpack.c.l.b16 %v237
        %v291 = vunpack.c.l.b16 %v238
        %v292 = vunpack.c.l.b16 %v239
        %v293 = vunpack.c.l.b16 %v240
        %v294 = vunpack.c.l.b16 %v241
        %v295 = vunpack.c.l.b16 %v242
        %v296 = vunpack.c.l.b16 %v243
        %v297 = vunpack.c.l.b16 %v244
        %v298 = vunpack.c.l.b16 %v245
        %v299 = vunpack.c.l.b16 %v246
        %v300 = vpack.c.b16 %v285, %v284
        %v301 = vpack.c.b16 %v287, %v286
        %v302 = vpack.c.b16 %v289, %v288
        %v303 = vpack.c.b16 %v291, %v290
        %v304 = vpack.c.b16 %v293, %v292
        %v305 = vpack.c.b16 %v295, %v294
        %v306 = vpack.c.b16 %v297, %v296
        %v307 = vpack.c.b16 %v299, %v298
        %v332 = vunpack.c.l.b16 %v252
        %v333 = vunpack.c.l.b16 %v253
        %v334 = vunpack.c.l.b16 %v254
        %v335 = vunpack.c.l.b16 %v255
        %v336 = vunpack.c.l.b16 %v256
        %v337 = vunpack.c.l.b16 %v257
        %v338 = vunpack.c.l.b16 %v258
        %v339 = vunpack.c.l.b16 %v259
        %v340 = vunpack.c.l.b16 %v260
        %v341 = vunpack.c.l.b16 %v261
        %v342 = vunpack.c.l.b16 %v262
        %v343 = vunpack.c.l.b16 %v263
        %v344 = vunpack.c.l.b16 %v264
        %v345 = vunpack.c.l.b16 %v265
        %v346 = vunpack.c.l.b16 %v266
        %v347 = vunpack.c.l.b16 %v267
        %v348 = vpack.c.b16 %v333, %v332
        %v349 = vpack.c.b16 %v335, %v334
        %v350 = vpack.c.b16 %v337, %v336
        %v351 = vpack.c.b16 %v339, %v338
        %v352 = vpack.c.b16 %v341, %v340
        %v353 = vpack.c.b16 %v343, %v342
        %v354 = vpack.c.b16 %v345, %v344
        %v355 = vpack.c.b16 %v347, %v346
        %364 = vmatprep.subr.bf16.mxu0 0
        %365 = vmatpush1.bf16.xpose.msra.mxu0 %v355
        %366 = vmatprep.subr.bf16.mxu0 0
        %367 = vmatpush1.bf16.xpose.msra.mxu0 %v354
        %368 = vmatprep.subr.bf16.mxu0 0
        %369 = vmatpush1.bf16.xpose.msra.mxu0 %v353
        %370 = vmatprep.subr.bf16.mxu0 0
        %371 = vmatpush1.bf16.xpose.msra.mxu0 %v352
        %372 = vmatprep.subr.bf16.mxu0 0
        %373 = vmatpush1.bf16.xpose.msra.mxu0 %v351
        %374 = vmatprep.subr.bf16.mxu0 0
        %375 = vmatpush1.bf16.xpose.msra.mxu0 %v350
        %376 = vmatprep.subr.bf16.mxu0 0
        %377 = vmatpush1.bf16.xpose.msra.mxu0 %v349
        %378 = vmatprep.subr.bf16.mxu0 0
        %379 = vmatpush1.bf16.xpose.msra.mxu0 %v348
        %380 = vmatprep.subr.bf16.mxu0 0
        %381 = vmatpush2.bf16.xpose.msra.mxu0 0
        %382 = vmatprep.subr.bf16.mxu0 0
        %383 = vmatpush2.bf16.xpose.msra.mxu0 0
        %384 = vmatprep.subr.bf16.mxu0 0
        %385 = vmatpush2.bf16.xpose.msra.mxu0 0
        %386 = vmatprep.subr.bf16.mxu0 0
        %387 = vmatpush2.bf16.xpose.msra.mxu0 0
        %388 = vmatprep.subr.bf16.mxu0 0
        %389 = vmatpush2.bf16.xpose.msra.mxu0 0
        %390 = vmatprep.subr.bf16.mxu0 0
        %391 = vmatpush2.bf16.xpose.msra.mxu0 0
        %392 = vmatprep.subr.bf16.mxu0 0
        %393 = vmatpush2.bf16.xpose.msra.mxu0 0
        %394 = vmatprep.subr.bf16.mxu0 0
        %395 = vmatpush2.bf16.xpose.msra.mxu0 0
        %396 = vmatprep.mubr.bf16.mxu0 0
        %397 = vmatmul.mubr.bf16.gmra.mxu0 %v300
        %v398 = vpop.f32.mrf.mxu0
        %v399 = vadd.f32 0.0, %v398
        %v400 = vpop.f32.mrf.mxu0
        %v401 = vpop.f32.mrf.mxu0
        %v402 = vadd.f32 0.0, %v401
        %v403 = vpop.f32.mrf.mxu0
        %404 = vmatprep.mubr.bf16.mxu0 0
        %405 = vmatmul.mubr.bf16.gmra.mxu0 %v301
        %v406 = vpop.f32.mrf.mxu0
        %v407 = vadd.f32 0.0, %v406
        %v408 = vpop.f32.mrf.mxu0
        %v409 = vpop.f32.mrf.mxu0
        %v410 = vadd.f32 0.0, %v409
        %v411 = vpop.f32.mrf.mxu0
        %412 = vmatprep.mubr.bf16.mxu0 0
        %413 = vmatmul.mubr.bf16.gmra.mxu0 %v302
        %v414 = vpop.f32.mrf.mxu0
        %v415 = vadd.f32 0.0, %v414
        %v416 = vpop.f32.mrf.mxu0
        %v417 = vpop.f32.mrf.mxu0
        %v418 = vadd.f32 0.0, %v417
        %v419 = vpop.f32.mrf.mxu0
        %420 = vmatprep.mubr.bf16.mxu0 0
        %421 = vmatmul.mubr.bf16.gmra.mxu0 %v303
        %v422 = vpop.f32.mrf.mxu0
        %v423 = vadd.f32 0.0, %v422
        %v424 = vpop.f32.mrf.mxu0
        %v425 = vpop.f32.mrf.mxu0
        %v426 = vadd.f32 0.0, %v425
        %v427 = vpop.f32.mrf.mxu0
        %428 = vmatprep.mubr.bf16.mxu0 0
        %429 = vmatmul.mubr.bf16.gmra.mxu0 %v304
        %v430 = vpop.f32.mrf.mxu0
        %v431 = vadd.f32 0.0, %v430
        %v432 = vpop.f32.mrf.mxu0
        %v433 = vpop.f32.mrf.mxu0
        %v434 = vadd.f32 0.0, %v433
        %v435 = vpop.f32.mrf.mxu0
        %436 = vmatprep.mubr.bf16.mxu0 0
        %437 = vmatmul.mubr.bf16.gmra.mxu0 %v305
        %v438 = vpop.f32.mrf.mxu0
        %v439 = vadd.f32 0.0, %v438
        %v440 = vpop.f32.mrf.mxu0
        %v441 = vpop.f32.mrf.mxu0
        %v442 = vadd.f32 0.0, %v441
        %v443 = vpop.f32.mrf.mxu0
        %444 = vmatprep.mubr.bf16.mxu0 0
        %445 = vmatmul.mubr.bf16.gmra.mxu0 %v306
        %v446 = vpop.f32.mrf.mxu0
        %v447 = vadd.f32 0.0, %v446
        %v448 = vpop.f32.mrf.mxu0
        %v449 = vpop.f32.mrf.mxu0
        %v450 = vadd.f32 0.0, %v449
        %v451 = vpop.f32.mrf.mxu0
        %452 = vmatprep.mubr.bf16.mxu0 0
        %453 = vmatmul.mubr.bf16.gmra.mxu0 %v307
        %v454 = vpop.f32.mrf.mxu0
        %v455 = vadd.f32 0.0, %v454
        %v456 = vpop.f32.mrf.mxu0
        %v457 = vpop.f32.mrf.mxu0
        %v458 = vadd.f32 0.0, %v457
        %v459 = vpop.f32.mrf.mxu0
        %460 = vdwg.mxu0
        %v461 = vmul.f32 %v399, 2.0
        %v462 = vmul.f32 %v402, 2.0
        %v463 = vmul.f32 %v407, 2.0
        %v464 = vmul.f32 %v410, 2.0
        %v465 = vmul.f32 %v415, 2.0
        %v466 = vmul.f32 %v418, 2.0
        %v467 = vmul.f32 %v423, 2.0
        %v468 = vmul.f32 %v426, 2.0
        %v469 = vmul.f32 %v431, 2.0
        %v470 = vmul.f32 %v434, 2.0
        %v471 = vmul.f32 %v439, 2.0
        %v472 = vmul.f32 %v442, 2.0
        %v473 = vmul.f32 %v447, 2.0
        %v474 = vmul.f32 %v450, 2.0
        %v475 = vmul.f32 %v455, 2.0
        %v476 = vmul.f32 %v458, 2.0
        %v477 = vlaneseq
        %v478 = vshrl.u32 %v477, 7
        %v479 = vadd.s32 %v478, 8
        %v480 = vadd.s32 %v478, 16
        %v481 = vadd.s32 %v478, 24
        %v482 = vadd.s32 %v478, 32
        %v483 = vadd.s32 %v478, 40
        %v484 = vadd.s32 %v478, 48
        %v485 = vadd.s32 %v478, 56
        %v486 = vadd.s32 %v478, 64
        %v487 = vadd.s32 %v478, 72
        %v488 = vadd.s32 %v478, 80
        %v489 = vadd.s32 %v478, 88
        %v490 = vadd.s32 %v478, 96
        %v491 = vadd.s32 %v478, 104
        %v492 = vadd.s32 %v478, 112
        %v493 = vadd.s32 %v478, 120
        %v494 = vlaneseq
        %v495 = vand.u32 %v494, 127
        %s496 = smul.u32 %s21, 128
        %v497 = vstv %s496
        %v498 = vadd.s32 %v497, %v478
        %v499 = vadd.s32 %v497, %v479
        %v500 = vadd.s32 %v497, %v480
        %v501 = vadd.s32 %v497, %v481
        %v502 = vadd.s32 %v497, %v482
        %v503 = vadd.s32 %v497, %v483
        %v504 = vadd.s32 %v497, %v484
        %v505 = vadd.s32 %v497, %v485
        %v506 = vadd.s32 %v497, %v486
        %v507 = vadd.s32 %v497, %v487
        %v508 = vadd.s32 %v497, %v488
        %v509 = vadd.s32 %v497, %v489
        %v510 = vadd.s32 %v497, %v490
        %v511 = vadd.s32 %v497, %v491
        %v512 = vadd.s32 %v497, %v492
        %v513 = vadd.s32 %v497, %v493
        %v514 = vstv %s247
        %v515 = vadd.s32 %v514, %v495
        %s516 = sadd.s32 %s21, 1
        %p517 = scmp.lt.s32.totalorder %s516, 0
        %s518 = ssub.s32 0, %s516
        %s519 = scalar_select %p517, %s518, %s516
        %s520 = sand.u32 %s519, 1
        %s521 = ssub.s32 0, %s520
        %s522 = scalar_select %p517, %s521, %s520
        %p523 = scmp.ne.s32.totalorder %s522, 0
        %p524 = scmp.lt.s32.totalorder %s522, 0
        %p525 = pnand %p524, %p523
        %p526 = pneg %p525
        %s527 = sadd.s32 %s522, 2
        %s528 = scalar_select %p526, %s527, %s522
        %p529 = scmp.eq.s32.totalorder %s22, %s528
        // Predicated region
        $region41: #{tpu_custom_call.1} parent=27 // pred_check
          %p530 = pneg %p529
        $region42: #{tpu_custom_call.1} parent=27 // pred_check_branch
          %532 = sbr.rel (%p530) target = $region44
        $region43: #{tpu_custom_call.1} parent=27 // pred_region
          %vm533 = vcmp.eq.s32.totalorder %v478, %v495
          %vm534 = vcmp.eq.s32.totalorder %v479, %v495
          %vm535 = vcmp.eq.s32.totalorder %v480, %v495
          %vm536 = vcmp.eq.s32.totalorder %v481, %v495
          %vm537 = vcmp.eq.s32.totalorder %v482, %v495
          %vm538 = vcmp.eq.s32.totalorder %v483, %v495
          %vm539 = vcmp.eq.s32.totalorder %v484, %v495
          %vm540 = vcmp.eq.s32.totalorder %v485, %v495
          %vm541 = vcmp.eq.s32.totalorder %v486, %v495
          %vm542 = vcmp.eq.s32.totalorder %v487, %v495
          %vm543 = vcmp.eq.s32.totalorder %v488, %v495
          %vm544 = vcmp.eq.s32.totalorder %v489, %v495
          %vm545 = vcmp.eq.s32.totalorder %v490, %v495
          %vm546 = vcmp.eq.s32.totalorder %v491, %v495
          %vm547 = vcmp.eq.s32.totalorder %v492, %v495
          %vm548 = vcmp.eq.s32.totalorder %v493, %v495
          %v549 = vsel %vm533, %v461, 0.0
          %v550 = vsel %vm534, %v462, 0.0
          %v551 = vsel %vm535, %v463, 0.0
          %v552 = vsel %vm536, %v464, 0.0
          %v553 = vsel %vm537, %v465, 0.0
          %v554 = vsel %vm538, %v466, 0.0
          %v555 = vsel %vm539, %v467, 0.0
          %v556 = vsel %vm540, %v468, 0.0
          %v557 = vsel %vm541, %v469, 0.0
          %v558 = vsel %vm542, %v470, 0.0
          %v559 = vsel %vm543, %v471, 0.0
          %v560 = vsel %vm544, %v472, 0.0
          %v561 = vsel %vm545, %v473, 0.0
          %v562 = vsel %vm546, %v474, 0.0
          %v563 = vsel %vm547, %v475, 0.0
          %v564 = vsel %vm548, %v476, 0.0
          %565 = vadd.xlane.f32.xlu0 %v549
          %v566 = vpop.xlane.xlu0 %565
          %567 = vadd.xlane.f32.xlu0 %v550
          %v568 = vpop.xlane.xlu0 %567
          %569 = vadd.xlane.f32.xlu0 %v551
          %v570 = vpop.xlane.xlu0 %569
          %571 = vadd.xlane.f32.xlu0 %v552
          %v572 = vpop.xlane.xlu0 %571
          %573 = vadd.xlane.f32.xlu0 %v553
          %v574 = vpop.xlane.xlu0 %573
          %575 = vadd.xlane.f32.xlu0 %v554
          %v576 = vpop.xlane.xlu0 %575
          %577 = vadd.xlane.f32.xlu0 %v555
          %v578 = vpop.xlane.xlu0 %577
          %579 = vadd.xlane.f32.xlu0 %v556
          %v580 = vpop.xlane.xlu0 %579
          %581 = vadd.xlane.f32.xlu0 %v557
          %v582 = vpop.xlane.xlu0 %581
          %583 = vadd.xlane.f32.xlu0 %v558
          %v584 = vpop.xlane.xlu0 %583
          %585 = vadd.xlane.f32.xlu0 %v559
          %v586 = vpop.xlane.xlu0 %585
          %587 = vadd.xlane.f32.xlu0 %v560
          %v588 = vpop.xlane.xlu0 %587
          %589 = vadd.xlane.f32.xlu0 %v561
          %v590 = vpop.xlane.xlu0 %589
          %591 = vadd.xlane.f32.xlu0 %v562
          %v592 = vpop.xlane.xlu0 %591
          %593 = vadd.xlane.f32.xlu0 %v563
          %v594 = vpop.xlane.xlu0 %593
          %595 = vadd.xlane.f32.xlu0 %v564
          %v596 = vpop.xlane.xlu0 %595
          %vm597 = vcmask 7168
          %598 = vst.msk [vmem:[#allocation4] sm:$0xff] %vm597, %v566
          %599 = vst.msk [vmem:[#allocation4 + $0x8] sm:$0xff] %vm597, %v568
          %600 = vst.msk [vmem:[#allocation4 + $0x10] sm:$0xff] %vm597, %v570
          %601 = vst.msk [vmem:[#allocation4 + $0x18] sm:$0xff] %vm597, %v572
          %602 = vst.msk [vmem:[#allocation4 + $0x20] sm:$0xff] %vm597, %v574
          %603 = vst.msk [vmem:[#allocation4 + $0x28] sm:$0xff] %vm597, %v576
          %604 = vst.msk [vmem:[#allocation4 + $0x30] sm:$0xff] %vm597, %v578
          %605 = vst.msk [vmem:[#allocation4 + $0x38] sm:$0xff] %vm597, %v580
          %606 = vst.msk [vmem:[#allocation4 + $0x40] sm:$0xff] %vm597, %v582
          %607 = vst.msk [vmem:[#allocation4 + $0x48] sm:$0xff] %vm597, %v584
          %608 = vst.msk [vmem:[#allocation4 + $0x50] sm:$0xff] %vm597, %v586
          %609 = vst.msk [vmem:[#allocation4 + $0x58] sm:$0xff] %vm597, %v588
          %610 = vst.msk [vmem:[#allocation4 + $0x60] sm:$0xff] %vm597, %v590
          %611 = vst.msk [vmem:[#allocation4 + $0x68] sm:$0xff] %vm597, %v592
          %612 = vst.msk [vmem:[#allocation4 + $0x70] sm:$0xff] %vm597, %v594
          %613 = vst.msk [vmem:[#allocation4 + $0x78] sm:$0xff] %vm597, %v596
        $region44: #{tpu_custom_call.1} parent=27 // pred_fallthru
          _
        %vm614 = vcmp.lt.s32.totalorder %v515, 0
        %v615 = vsub.s32 0, %v515
        %v616 = vsel %vm614, %v615, %v515
        %v617 = vshrl.u32 %v616, 7
        %v618 = vand.u32 %v616, 127
        %v619 = vsub.s32 0, %v618
        %v620 = vsel %vm614, %v619, %v618
        %vm621 = vcmp.ne.s32.totalorder %v620, 0
        %vm622 = vcmp.lt.s32.totalorder %v620, 0
        %vm623 = vmand %vm622, %vm621
        %v624 = vadd.s32 %v620, 128
        %v625 = vsel %vm623, %v624, %v620
        %vm626 = vcmp.ge.s32.totalorder %v625, 8
        %vm627 = vcmp.eq.s32.totalorder %v498, %v515
        %vm628 = vcmp.eq.s32.totalorder %v499, %v515
        %vm629 = vcmp.eq.s32.totalorder %v500, %v515
        %vm630 = vcmp.eq.s32.totalorder %v501, %v515
        %vm631 = vcmp.eq.s32.totalorder %v502, %v515
        %vm632 = vcmp.eq.s32.totalorder %v503, %v515
        %vm633 = vcmp.eq.s32.totalorder %v504, %v515
        %vm634 = vcmp.eq.s32.totalorder %v505, %v515
        %vm635 = vcmp.eq.s32.totalorder %v506, %v515
        %vm636 = vcmp.eq.s32.totalorder %v507, %v515
        %vm637 = vcmp.eq.s32.totalorder %v508, %v515
        %vm638 = vcmp.eq.s32.totalorder %v509, %v515
        %vm639 = vcmp.eq.s32.totalorder %v510, %v515
        %vm640 = vcmp.eq.s32.totalorder %v511, %v515
        %vm641 = vcmp.eq.s32.totalorder %v512, %v515
        %vm642 = vcmp.eq.s32.totalorder %v513, %v515
        %v643 = vsel %vm626, 1, 0
        %vm644 = vcmp.eq.s32.totalorder %v643, 1
        %vm645 = vmor %vm627, %vm644
        %vm646 = vmor %vm628, %vm644
        %vm647 = vmor %vm629, %vm644
        %vm648 = vmor %vm630, %vm644
        %vm649 = vmor %vm631, %vm644
        %vm650 = vmor %vm632, %vm644
        %vm651 = vmor %vm633, %vm644
        %vm652 = vmor %vm634, %vm644
        %vm653 = vmor %vm635, %vm644
        %vm654 = vmor %vm636, %vm644
        %vm655 = vmor %vm637, %vm644
        %vm656 = vmor %vm638, %vm644
        %vm657 = vmor %vm639, %vm644
        %vm658 = vmor %vm640, %vm644
        %vm659 = vmor %vm641, %vm644
        %vm660 = vmor %vm642, %vm644
        %v661 = vsel %vm645, -1e+30, %v461
        %v662 = vsel %vm646, -1e+30, %v462
        %v663 = vsel %vm647, -1e+30, %v463
        %v664 = vsel %vm648, -1e+30, %v464
        %v665 = vsel %vm649, -1e+30, %v465
        %v666 = vsel %vm650, -1e+30, %v466
        %v667 = vsel %vm651, -1e+30, %v467
        %v668 = vsel %vm652, -1e+30, %v468
        %v669 = vsel %vm653, -1e+30, %v469
        %v670 = vsel %vm654, -1e+30, %v470
        %v671 = vsel %vm655, -1e+30, %v471
        %v672 = vsel %vm656, -1e+30, %v472
        %v673 = vsel %vm657, -1e+30, %v473
        %v674 = vsel %vm658, -1e+30, %v474
        %v675 = vsel %vm659, -1e+30, %v475
        %v676 = vsel %vm660, -1e+30, %v476
        %v677 = vld [vmem:[#allocation2] sm:$0xff]
        %v678 = vld [vmem:[#allocation2 + $0x8] sm:$0xff]
        %v679 = vld [vmem:[#allocation2 + $0x10] sm:$0xff]
        %v680 = vld [vmem:[#allocation2 + $0x18] sm:$0xff]
        %v681 = vld [vmem:[#allocation2 + $0x20] sm:$0xff]
        %v682 = vld [vmem:[#allocation2 + $0x28] sm:$0xff]
        %v683 = vld [vmem:[#allocation2 + $0x30] sm:$0xff]
        %v684 = vld [vmem:[#allocation2 + $0x38] sm:$0xff]
        %v685 = vld [vmem:[#allocation2 + $0x40] sm:$0xff]
        %v686 = vld [vmem:[#allocation2 + $0x48] sm:$0xff]
        %v687 = vld [vmem:[#allocation2 + $0x50] sm:$0xff]
        %v688 = vld [vmem:[#allocation2 + $0x58] sm:$0xff]
        %v689 = vld [vmem:[#allocation2 + $0x60] sm:$0xff]
        %v690 = vld [vmem:[#allocation2 + $0x68] sm:$0xff]
        %v691 = vld [vmem:[#allocation2 + $0x70] sm:$0xff]
        %v692 = vld [vmem:[#allocation2 + $0x78] sm:$0xff]
        %693 = vmax.xlane.f32.xlu0 %v661
        %v694 = vpop.xlane.xlu0 %693
        %695 = vmax.xlane.f32.xlu0 %v662
        %v696 = vpop.xlane.xlu0 %695
        %697 = vmax.xlane.f32.xlu0 %v663
        %v698 = vpop.xlane.xlu0 %697
        %699 = vmax.xlane.f32.xlu0 %v664
        %v700 = vpop.xlane.xlu0 %699
        %701 = vmax.xlane.f32.xlu0 %v665
        %v702 = vpop.xlane.xlu0 %701
        %703 = vmax.xlane.f32.xlu0 %v666
        %v704 = vpop.xlane.xlu0 %703
        %705 = vmax.xlane.f32.xlu0 %v667
        %v706 = vpop.xlane.xlu0 %705
        %707 = vmax.xlane.f32.xlu0 %v668
        %v708 = vpop.xlane.xlu0 %707
        %709 = vmax.xlane.f32.xlu0 %v669
        %v710 = vpop.xlane.xlu0 %709
        %711 = vmax.xlane.f32.xlu0 %v670
        %v712 = vpop.xlane.xlu0 %711
        %713 = vmax.xlane.f32.xlu0 %v671
        %v714 = vpop.xlane.xlu0 %713
        %715 = vmax.xlane.f32.xlu0 %v672
        %v716 = vpop.xlane.xlu0 %715
        %717 = vmax.xlane.f32.xlu0 %v673
        %v718 = vpop.xlane.xlu0 %717
        %719 = vmax.xlane.f32.xlu0 %v674
        %v720 = vpop.xlane.xlu0 %719
        %721 = vmax.xlane.f32.xlu0 %v675
        %v722 = vpop.xlane.xlu0 %721
        %723 = vmax.xlane.f32.xlu0 %v676
        %v724 = vpop.xlane.xlu0 %723
        %v725 = vmax.f32 %v677, %v694
        %v726 = vmax.f32 %v678, %v696
        %v727 = vmax.f32 %v679, %v698
        %v728 = vmax.f32 %v680, %v700
        %v729 = vmax.f32 %v681, %v702
        %v730 = vmax.f32 %v682, %v704
        %v731 = vmax.f32 %v683, %v706
        %v732 = vmax.f32 %v684, %v708
        %v733 = vmax.f32 %v685, %v710
        %v734 = vmax.f32 %v686, %v712
        %v735 = vmax.f32 %v687, %v714
        %v736 = vmax.f32 %v688, %v716
        %v737 = vmax.f32 %v689, %v718
        %v738 = vmax.f32 %v690, %v720
        %v739 = vmax.f32 %v691, %v722
        %v740 = vmax.f32 %v692, %v724
        %742 = vset.pattern.permute.xlu0 0
        %743 = vperm.xlu0 %742, %v725
        %v744 = vpop.permute.xlu0 %743
        %747 = vset.pattern.permute.xlu0 0
        %748 = vperm.xlu0 %747, %v726
        %v749 = vpop.permute.xlu0 %748
        %752 = vset.pattern.permute.xlu0 0
        %753 = vperm.xlu0 %752, %v727
        %v754 = vpop.permute.xlu0 %753
        %757 = vset.pattern.permute.xlu0 0
        %758 = vperm.xlu0 %757, %v728
        %v759 = vpop.permute.xlu0 %758
        %762 = vset.pattern.permute.xlu0 0
        %763 = vperm.xlu0 %762, %v729
        %v764 = vpop.permute.xlu0 %763
        %767 = vset.pattern.permute.xlu0 0
        %768 = vperm.xlu0 %767, %v730
        %v769 = vpop.permute.xlu0 %768
        %772 = vset.pattern.permute.xlu0 0
        %773 = vperm.xlu0 %772, %v731
        %v774 = vpop.permute.xlu0 %773
        %777 = vset.pattern.permute.xlu0 0
        %778 = vperm.xlu0 %777, %v732
        %v779 = vpop.permute.xlu0 %778
        %782 = vset.pattern.permute.xlu0 0
        %783 = vperm.xlu0 %782, %v733
        %v784 = vpop.permute.xlu0 %783
        %787 = vset.pattern.permute.xlu0 0
        %788 = vperm.xlu0 %787, %v734
        %v789 = vpop.permute.xlu0 %788
        %792 = vset.pattern.permute.xlu0 0
        %793 = vperm.xlu0 %792, %v735
        %v794 = vpop.permute.xlu0 %793
        %797 = vset.pattern.permute.xlu0 0
        %798 = vperm.xlu0 %797, %v736
        %v799 = vpop.permute.xlu0 %798
        %802 = vset.pattern.permute.xlu0 0
        %803 = vperm.xlu0 %802, %v737
        %v804 = vpop.permute.xlu0 %803
        %807 = vset.pattern.permute.xlu0 0
        %808 = vperm.xlu0 %807, %v738
        %v809 = vpop.permute.xlu0 %808
        %812 = vset.pattern.permute.xlu0 0
        %813 = vperm.xlu0 %812, %v739
        %v814 = vpop.permute.xlu0 %813
        %817 = vset.pattern.permute.xlu0 0
        %818 = vperm.xlu0 %817, %v740
        %v819 = vpop.permute.xlu0 %818
        %v821 = vsub.f32 %v661, %v744
        %v822 = vsub.f32 %v662, %v749
        %v823 = vsub.f32 %v663, %v754
        %v824 = vsub.f32 %v664, %v759
        %v825 = vsub.f32 %v665, %v764
        %v826 = vsub.f32 %v666, %v769
        %v827 = vsub.f32 %v667, %v774
        %v828 = vsub.f32 %v668, %v779
        %v829 = vsub.f32 %v669, %v784
        %v830 = vsub.f32 %v670, %v789
        %v831 = vsub.f32 %v671, %v794
        %v832 = vsub.f32 %v672, %v799
        %v833 = vsub.f32 %v673, %v804
        %v834 = vsub.f32 %v674, %v809
        %v835 = vsub.f32 %v675, %v814
        %v836 = vsub.f32 %v676, %v819
        %v837 = vmul.f32 %v821, 1.442695
        %v838 = vpow.pop %v837
        %v839 = vmul.f32 %v822, 1.442695
        %v840 = vpow.pop %v839
        %v841 = vmul.f32 %v823, 1.442695
        %v842 = vpow.pop %v841
        %v843 = vmul.f32 %v824, 1.442695
        %v844 = vpow.pop %v843
        %v845 = vmul.f32 %v825, 1.442695
        %v846 = vpow.pop %v845
        %v847 = vmul.f32 %v826, 1.442695
        %v848 = vpow.pop %v847
        %v849 = vmul.f32 %v827, 1.442695
        %v850 = vpow.pop %v849
        %v851 = vmul.f32 %v828, 1.442695
        %v852 = vpow.pop %v851
        %v853 = vmul.f32 %v829, 1.442695
        %v854 = vpow.pop %v853
        %v855 = vmul.f32 %v830, 1.442695
        %v856 = vpow.pop %v855
        %v857 = vmul.f32 %v831, 1.442695
        %v858 = vpow.pop %v857
        %v859 = vmul.f32 %v832, 1.442695
        %v860 = vpow.pop %v859
        %v861 = vmul.f32 %v833, 1.442695
        %v862 = vpow.pop %v861
        %v863 = vmul.f32 %v834, 1.442695
        %v864 = vpow.pop %v863
        %v865 = vmul.f32 %v835, 1.442695
        %v866 = vpow.pop %v865
        %v867 = vmul.f32 %v836, 1.442695
        %v868 = vpow.pop %v867
        %v869 = vsub.f32 %v677, %v725
        %v870 = vsub.f32 %v678, %v726
        %v871 = vsub.f32 %v679, %v727
        %v872 = vsub.f32 %v680, %v728
        %v873 = vsub.f32 %v681, %v729
        %v874 = vsub.f32 %v682, %v730
        %v875 = vsub.f32 %v683, %v731
        %v876 = vsub.f32 %v684, %v732
        %v877 = vsub.f32 %v685, %v733
        %v878 = vsub.f32 %v686, %v734
        %v879 = vsub.f32 %v687, %v735
        %v880 = vsub.f32 %v688, %v736
        %v881 = vsub.f32 %v689, %v737
        %v882 = vsub.f32 %v690, %v738
        %v883 = vsub.f32 %v691, %v739
        %v884 = vsub.f32 %v692, %v740
        %v885 = vmul.f32 %v869, 1.442695
        %v886 = vpow.pop %v885
        %v887 = vmul.f32 %v870, 1.442695
        %v888 = vpow.pop %v887
        %v889 = vmul.f32 %v871, 1.442695
        %v890 = vpow.pop %v889
        %v891 = vmul.f32 %v872, 1.442695
        %v892 = vpow.pop %v891
        %v893 = vmul.f32 %v873, 1.442695
        %v894 = vpow.pop %v893
        %v895 = vmul.f32 %v874, 1.442695
        %v896 = vpow.pop %v895
        %v897 = vmul.f32 %v875, 1.442695
        %v898 = vpow.pop %v897
        %v899 = vmul.f32 %v876, 1.442695
        %v900 = vpow.pop %v899
        %v901 = vmul.f32 %v877, 1.442695
        %v902 = vpow.pop %v901
        %v903 = vmul.f32 %v878, 1.442695
        %v904 = vpow.pop %v903
        %v905 = vmul.f32 %v879, 1.442695
        %v906 = vpow.pop %v905
        %v907 = vmul.f32 %v880, 1.442695
        %v908 = vpow.pop %v907
        %v909 = vmul.f32 %v881, 1.442695
        %v910 = vpow.pop %v909
        %v911 = vmul.f32 %v882, 1.442695
        %v912 = vpow.pop %v911
        %v913 = vmul.f32 %v883, 1.442695
        %v914 = vpow.pop %v913
        %v915 = vmul.f32 %v884, 1.442695
        %v916 = vpow.pop %v915
        %v917 = vld [vmem:[#allocation3] sm:$0xff]
        %v918 = vld [vmem:[#allocation3 + $0x8] sm:$0xff]
        %v919 = vld [vmem:[#allocation3 + $0x10] sm:$0xff]
        %v920 = vld [vmem:[#allocation3 + $0x18] sm:$0xff]
        %v921 = vld [vmem:[#allocation3 + $0x20] sm:$0xff]
        %v922 = vld [vmem:[#allocation3 + $0x28] sm:$0xff]
        %v923 = vld [vmem:[#allocation3 + $0x30] sm:$0xff]
        %v924 = vld [vmem:[#allocation3 + $0x38] sm:$0xff]
        %v925 = vld [vmem:[#allocation3 + $0x40] sm:$0xff]
        %v926 = vld [vmem:[#allocation3 + $0x48] sm:$0xff]
        %v927 = vld [vmem:[#allocation3 + $0x50] sm:$0xff]
        %v928 = vld [vmem:[#allocation3 + $0x58] sm:$0xff]
        %v929 = vld [vmem:[#allocation3 + $0x60] sm:$0xff]
        %v930 = vld [vmem:[#allocation3 + $0x68] sm:$0xff]
        %v931 = vld [vmem:[#allocation3 + $0x70] sm:$0xff]
        %v932 = vld [vmem:[#allocation3 + $0x78] sm:$0xff]
        %v933 = vmul.f32 %v886, %v917
        %v934 = vmul.f32 %v888, %v918
        %v935 = vmul.f32 %v890, %v919
        %v936 = vmul.f32 %v892, %v920
        %v937 = vmul.f32 %v894, %v921
        %v938 = vmul.f32 %v896, %v922
        %v939 = vmul.f32 %v898, %v923
        %v940 = vmul.f32 %v900, %v924
        %v941 = vmul.f32 %v902, %v925
        %v942 = vmul.f32 %v904, %v926
        %v943 = vmul.f32 %v906, %v927
        %v944 = vmul.f32 %v908, %v928
        %v945 = vmul.f32 %v910, %v929
        %v946 = vmul.f32 %v912, %v930
        %v947 = vmul.f32 %v914, %v931
        %v948 = vmul.f32 %v916, %v932
        %949 = vadd.xlane.f32.xlu0 %v838
        %v950 = vpop.xlane.xlu0 %949
        %951 = vadd.xlane.f32.xlu0 %v840
        %v952 = vpop.xlane.xlu0 %951
        %953 = vadd.xlane.f32.xlu0 %v842
        %v954 = vpop.xlane.xlu0 %953
        %955 = vadd.xlane.f32.xlu0 %v844
        %v956 = vpop.xlane.xlu0 %955
        %957 = vadd.xlane.f32.xlu0 %v846
        %v958 = vpop.xlane.xlu0 %957
        %959 = vadd.xlane.f32.xlu0 %v848
        %v960 = vpop.xlane.xlu0 %959
        %961 = vadd.xlane.f32.xlu0 %v850
        %v962 = vpop.xlane.xlu0 %961
        %963 = vadd.xlane.f32.xlu0 %v852
        %v964 = vpop.xlane.xlu0 %963
        %965 = vadd.xlane.f32.xlu0 %v854
        %v966 = vpop.xlane.xlu0 %965
        %967 = vadd.xlane.f32.xlu0 %v856
        %v968 = vpop.xlane.xlu0 %967
        %969 = vadd.xlane.f32.xlu0 %v858
        %v970 = vpop.xlane.xlu0 %969
        %971 = vadd.xlane.f32.xlu0 %v860
        %v972 = vpop.xlane.xlu0 %971
        %973 = vadd.xlane.f32.xlu0 %v862
        %v974 = vpop.xlane.xlu0 %973
        %975 = vadd.xlane.f32.xlu0 %v864
        %v976 = vpop.xlane.xlu0 %975
        %977 = vadd.xlane.f32.xlu0 %v866
        %v978 = vpop.xlane.xlu0 %977
        %979 = vadd.xlane.f32.xlu0 %v868
        %v980 = vpop.xlane.xlu0 %979
        %v981 = vadd.f32 %v933, %v950
        %v982 = vadd.f32 %v934, %v952
        %v983 = vadd.f32 %v935, %v954
        %v984 = vadd.f32 %v936, %v956
        %v985 = vadd.f32 %v937, %v958
        %v986 = vadd.f32 %v938, %v960
        %v987 = vadd.f32 %v939, %v962
        %v988 = vadd.f32 %v940, %v964
        %v989 = vadd.f32 %v941, %v966
        %v990 = vadd.f32 %v942, %v968
        %v991 = vadd.f32 %v943, %v970
        %v992 = vadd.f32 %v944, %v972
        %v993 = vadd.f32 %v945, %v974
        %v994 = vadd.f32 %v946, %v976
        %v995 = vadd.f32 %v947, %v978
        %v996 = vadd.f32 %v948, %v980
        %vm997 = vcmask 7168
        %998 = vst.msk [vmem:[#allocation3] sm:$0xff] %vm997, %v981
        %999 = vst.msk [vmem:[#allocation3 + $0x8] sm:$0xff] %vm997, %v982
        %1000 = vst.msk [vmem:[#allocation3 + $0x10] sm:$0xff] %vm997, %v983
        %1001 = vst.msk [vmem:[#allocation3 + $0x18] sm:$0xff] %vm997, %v984
        %1002 = vst.msk [vmem:[#allocation3 + $0x20] sm:$0xff] %vm997, %v985
        %1003 = vst.msk [vmem:[#allocation3 + $0x28] sm:$0xff] %vm997, %v986
        %1004 = vst.msk [vmem:[#allocation3 + $0x30] sm:$0xff] %vm997, %v987
        %1005 = vst.msk [vmem:[#allocation3 + $0x38] sm:$0xff] %vm997, %v988
        %1006 = vst.msk [vmem:[#allocation3 + $0x40] sm:$0xff] %vm997, %v989
        %1007 = vst.msk [vmem:[#allocation3 + $0x48] sm:$0xff] %vm997, %v990
        %1008 = vst.msk [vmem:[#allocation3 + $0x50] sm:$0xff] %vm997, %v991
        %1009 = vst.msk [vmem:[#allocation3 + $0x58] sm:$0xff] %vm997, %v992
        %1010 = vst.msk [vmem:[#allocation3 + $0x60] sm:$0xff] %vm997, %v993
        %1011 = vst.msk [vmem:[#allocation3 + $0x68] sm:$0xff] %vm997, %v994
        %1012 = vst.msk [vmem:[#allocation3 + $0x70] sm:$0xff] %vm997, %v995
        %1013 = vst.msk [vmem:[#allocation3 + $0x78] sm:$0xff] %vm997, %v996
        %1014 = vst.msk [vmem:[#allocation2] sm:$0xff] %vm997, %v725
        %1015 = vst.msk [vmem:[#allocation2 + $0x8] sm:$0xff] %vm997, %v726
        %1016 = vst.msk [vmem:[#allocation2 + $0x10] sm:$0xff] %vm997, %v727
        %1017 = vst.msk [vmem:[#allocation2 + $0x18] sm:$0xff] %vm997, %v728
        %1018 = vst.msk [vmem:[#allocation2 + $0x20] sm:$0xff] %vm997, %v729
        %1019 = vst.msk [vmem:[#allocation2 + $0x28] sm:$0xff] %vm997, %v730
        %1020 = vst.msk [vmem:[#allocation2 + $0x30] sm:$0xff] %vm997, %v731
        %1021 = vst.msk [vmem:[#allocation2 + $0x38] sm:$0xff] %vm997, %v732
        %1022 = vst.msk [vmem:[#allocation2 + $0x40] sm:$0xff] %vm997, %v733
        %1023 = vst.msk [vmem:[#allocation2 + $0x48] sm:$0xff] %vm997, %v734
        %1024 = vst.msk [vmem:[#allocation2 + $0x50] sm:$0xff] %vm997, %v735
        %1025 = vst.msk [vmem:[#allocation2 + $0x58] sm:$0xff] %vm997, %v736
        %1026 = vst.msk [vmem:[#allocation2 + $0x60] sm:$0xff] %vm997, %v737
        %1027 = vst.msk [vmem:[#allocation2 + $0x68] sm:$0xff] %vm997, %v738
        %1028 = vst.msk [vmem:[#allocation2 + $0x70] sm:$0xff] %vm997, %v739
        %1029 = vst.msk [vmem:[#allocation2 + $0x78] sm:$0xff] %vm997, %v740
        %p1030 = scmp.eq.s32.totalorder %s22, 1
        // Predicated region
        $region45: #{tpu_custom_call.1} parent=27 // pred_check
          %p1031 = pneg %p1030
        $region46: #{tpu_custom_call.1} parent=27 // pred_check_branch
          %1033 = sbr.rel (%p1031) target = $region48
        $region47: #{tpu_custom_call.1} parent=27 // pred_region
          %v1034 = vld [vmem:[#allocation2] sm:$0xff]
          %v1035 = vld [vmem:[#allocation2 + $0x8] sm:$0xff]
          %v1036 = vld [vmem:[#allocation2 + $0x10] sm:$0xff]
          %v1037 = vld [vmem:[#allocation2 + $0x18] sm:$0xff]
          %v1038 = vld [vmem:[#allocation2 + $0x20] sm:$0xff]
          %v1039 = vld [vmem:[#allocation2 + $0x28] sm:$0xff]
          %v1040 = vld [vmem:[#allocation2 + $0x30] sm:$0xff]
          %v1041 = vld [vmem:[#allocation2 + $0x38] sm:$0xff]
          %v1042 = vld [vmem:[#allocation2 + $0x40] sm:$0xff]
          %v1043 = vld [vmem:[#allocation2 + $0x48] sm:$0xff]
          %v1044 = vld [vmem:[#allocation2 + $0x50] sm:$0xff]
          %v1045 = vld [vmem:[#allocation2 + $0x58] sm:$0xff]
          %v1046 = vld [vmem:[#allocation2 + $0x60] sm:$0xff]
          %v1047 = vld [vmem:[#allocation2 + $0x68] sm:$0xff]
          %v1048 = vld [vmem:[#allocation2 + $0x70] sm:$0xff]
          %v1049 = vld [vmem:[#allocation2 + $0x78] sm:$0xff]
          %v1050 = vld [vmem:[#allocation3] sm:$0xff]
          %v1051 = vld [vmem:[#allocation3 + $0x8] sm:$0xff]
          %v1052 = vld [vmem:[#allocation3 + $0x10] sm:$0xff]
          %v1053 = vld [vmem:[#allocation3 + $0x18] sm:$0xff]
          %v1054 = vld [vmem:[#allocation3 + $0x20] sm:$0xff]
          %v1055 = vld [vmem:[#allocation3 + $0x28] sm:$0xff]
          %v1056 = vld [vmem:[#allocation3 + $0x30] sm:$0xff]
          %v1057 = vld [vmem:[#allocation3 + $0x38] sm:$0xff]
          %v1058 = vld [vmem:[#allocation3 + $0x40] sm:$0xff]
          %v1059 = vld [vmem:[#allocation3 + $0x48] sm:$0xff]
          %v1060 = vld [vmem:[#allocation3 + $0x50] sm:$0xff]
          %v1061 = vld [vmem:[#allocation3 + $0x58] sm:$0xff]
          %v1062 = vld [vmem:[#allocation3 + $0x60] sm:$0xff]
          %v1063 = vld [vmem:[#allocation3 + $0x68] sm:$0xff]
          %v1064 = vld [vmem:[#allocation3 + $0x70] sm:$0xff]
          %v1065 = vld [vmem:[#allocation3 + $0x78] sm:$0xff]
          %v1066 = vlog2.pop %v1050
          %v1067 = vmul.f32 %v1066, 0.6931472
          %v1068 = vlog2.pop %v1051
          %v1069 = vmul.f32 %v1068, 0.6931472
          %v1070 = vlog2.pop %v1052
          %v1071 = vmul.f32 %v1070, 0.6931472
          %v1072 = vlog2.pop %v1053
          %v1073 = vmul.f32 %v1072, 0.6931472
          %v1074 = vlog2.pop %v1054
          %v1075 = vmul.f32 %v1074, 0.6931472
          %v1076 = vlog2.pop %v1055
          %v1077 = vmul.f32 %v1076, 0.6931472
          %v1078 = vlog2.pop %v1056
          %v1079 = vmul.f32 %v1078, 0.6931472
          %v1080 = vlog2.pop %v1057
          %v1081 = vmul.f32 %v1080, 0.6931472
          %v1082 = vlog2.pop %v1058
          %v1083 = vmul.f32 %v1082, 0.6931472
          %v1084 = vlog2.pop %v1059
          %v1085 = vmul.f32 %v1084, 0.6931472
          %v1086 = vlog2.pop %v1060
          %v1087 = vmul.f32 %v1086, 0.6931472
          %v1088 = vlog2.pop %v1061
          %v1089 = vmul.f32 %v1088, 0.6931472
          %v1090 = vlog2.pop %v1062
          %v1091 = vmul.f32 %v1090, 0.6931472
          %v1092 = vlog2.pop %v1063
          %v1093 = vmul.f32 %v1092, 0.6931472
          %v1094 = vlog2.pop %v1064
          %v1095 = vmul.f32 %v1094, 0.6931472
          %v1096 = vlog2.pop %v1065
          %v1097 = vmul.f32 %v1096, 0.6931472
          %v1098 = vadd.f32 %v1034, %v1067
          %v1099 = vadd.f32 %v1035, %v1069
          %v1100 = vadd.f32 %v1036, %v1071
          %v1101 = vadd.f32 %v1037, %v1073
          %v1102 = vadd.f32 %v1038, %v1075
          %v1103 = vadd.f32 %v1039, %v1077
          %v1104 = vadd.f32 %v1040, %v1079
          %v1105 = vadd.f32 %v1041, %v1081
          %v1106 = vadd.f32 %v1042, %v1083
          %v1107 = vadd.f32 %v1043, %v1085
          %v1108 = vadd.f32 %v1044, %v1087
          %v1109 = vadd.f32 %v1045, %v1089
          %v1110 = vadd.f32 %v1046, %v1091
          %v1111 = vadd.f32 %v1047, %v1093
          %v1112 = vadd.f32 %v1048, %v1095
          %v1113 = vadd.f32 %v1049, %v1097
          %vm1114 = vcmp.lt.s32.totalorder %v498, 0
          %v1115 = vsub.s32 0, %v498
          %v1116 = vsel %vm1114, %v1115, %v498
          %v1117 = vshrl.u32 %v1116, 7
          %v1118 = vand.u32 %v1116, 127
          %v1119 = vsub.s32 0, %v1118
          %v1120 = vsel %vm1114, %v1119, %v1118
          %vm1121 = vcmp.lt.s32.totalorder %v499, 0
          %v1122 = vsub.s32 0, %v499
          %v1123 = vsel %vm1121, %v1122, %v499
          %v1124 = vshrl.u32 %v1123, 7
          %v1125 = vand.u32 %v1123, 127
          %v1126 = vsub.s32 0, %v1125
          %v1127 = vsel %vm1121, %v1126, %v1125
          %vm1128 = vcmp.lt.s32.totalorder %v500, 0
          %v1129 = vsub.s32 0, %v500
          %v1130 = vsel %vm1128, %v1129, %v500
          %v1131 = vshrl.u32 %v1130, 7
          %v1132 = vand.u32 %v1130, 127
          %v1133 = vsub.s32 0, %v1132
          %v1134 = vsel %vm1128, %v1133, %v1132
          %vm1135 = vcmp.lt.s32.totalorder %v501, 0
          %v1136 = vsub.s32 0, %v501
          %v1137 = vsel %vm1135, %v1136, %v501
          %v1138 = vshrl.u32 %v1137, 7
          %v1139 = vand.u32 %v1137, 127
          %v1140 = vsub.s32 0, %v1139
          %v1141 = vsel %vm1135, %v1140, %v1139
          %vm1142 = vcmp.lt.s32.totalorder %v502, 0
          %v1143 = vsub.s32 0, %v502
          %v1144 = vsel %vm1142, %v1143, %v502
          %v1145 = vshrl.u32 %v1144, 7
          %v1146 = vand.u32 %v1144, 127
          %v1147 = vsub.s32 0, %v1146
          %v1148 = vsel %vm1142, %v1147, %v1146
          %vm1149 = vcmp.lt.s32.totalorder %v503, 0
          %v1150 = vsub.s32 0, %v503
          %v1151 = vsel %vm1149, %v1150, %v503
          %v1152 = vshrl.u32 %v1151, 7
          %v1153 = vand.u32 %v1151, 127
          %v1154 = vsub.s32 0, %v1153
          %v1155 = vsel %vm1149, %v1154, %v1153
          %vm1156 = vcmp.lt.s32.totalorder %v504, 0
          %v1157 = vsub.s32 0, %v504
          %v1158 = vsel %vm1156, %v1157, %v504
          %v1159 = vshrl.u32 %v1158, 7
          %v1160 = vand.u32 %v1158, 127
          %v1161 = vsub.s32 0, %v1160
          %v1162 = vsel %vm1156, %v1161, %v1160
          %vm1163 = vcmp.lt.s32.totalorder %v505, 0
          %v1164 = vsub.s32 0, %v505
          %v1165 = vsel %vm1163, %v1164, %v505
          %v1166 = vshrl.u32 %v1165, 7
          %v1167 = vand.u32 %v1165, 127
          %v1168 = vsub.s32 0, %v1167
          %v1169 = vsel %vm1163, %v1168, %v1167
          %vm1170 = vcmp.lt.s32.totalorder %v506, 0
          %v1171 = vsub.s32 0, %v506
          %v1172 = vsel %vm1170, %v1171, %v506
          %v1173 = vshrl.u32 %v1172, 7
          %v1174 = vand.u32 %v1172, 127
          %v1175 = vsub.s32 0, %v1174
          %v1176 = vsel %vm1170, %v1175, %v1174
          %vm1177 = vcmp.lt.s32.totalorder %v507, 0
          %v1178 = vsub.s32 0, %v507
          %v1179 = vsel %vm1177, %v1178, %v507
          %v1180 = vshrl.u32 %v1179, 7
          %v1181 = vand.u32 %v1179, 127
          %v1182 = vsub.s32 0, %v1181
          %v1183 = vsel %vm1177, %v1182, %v1181
          %vm1184 = vcmp.lt.s32.totalorder %v508, 0
          %v1185 = vsub.s32 0, %v508
          %v1186 = vsel %vm1184, %v1185, %v508
          %v1187 = vshrl.u32 %v1186, 7
          %v1188 = vand.u32 %v1186, 127
          %v1189 = vsub.s32 0, %v1188
          %v1190 = vsel %vm1184, %v1189, %v1188
          %vm1191 = vcmp.lt.s32.totalorder %v509, 0
          %v1192 = vsub.s32 0, %v509
          %v1193 = vsel %vm1191, %v1192, %v509
          %v1194 = vshrl.u32 %v1193, 7
          %v1195 = vand.u32 %v1193, 127
          %v1196 = vsub.s32 0, %v1195
          %v1197 = vsel %vm1191, %v1196, %v1195
          %vm1198 = vcmp.lt.s32.totalorder %v510, 0
          %v1199 = vsub.s32 0, %v510
          %v1200 = vsel %vm1198, %v1199, %v510
          %v1201 = vshrl.u32 %v1200, 7
          %v1202 = vand.u32 %v1200, 127
          %v1203 = vsub.s32 0, %v1202
          %v1204 = vsel %vm1198, %v1203, %v1202
          %vm1205 = vcmp.lt.s32.totalorder %v511, 0
          %v1206 = vsub.s32 0, %v511
          %v1207 = vsel %vm1205, %v1206, %v511
          %v1208 = vshrl.u32 %v1207, 7
          %v1209 = vand.u32 %v1207, 127
          %v1210 = vsub.s32 0, %v1209
          %v1211 = vsel %vm1205, %v1210, %v1209
          %vm1212 = vcmp.lt.s32.totalorder %v512, 0
          %v1213 = vsub.s32 0, %v512
          %v1214 = vsel %vm1212, %v1213, %v512
          %v1215 = vshrl.u32 %v1214, 7
          %v1216 = vand.u32 %v1214, 127
          %v1217 = vsub.s32 0, %v1216
          %v1218 = vsel %vm1212, %v1217, %v1216
          %vm1219 = vcmp.lt.s32.totalorder %v513, 0
          %v1220 = vsub.s32 0, %v513
          %v1221 = vsel %vm1219, %v1220, %v513
          %v1222 = vshrl.u32 %v1221, 7
          %v1223 = vand.u32 %v1221, 127
          %v1224 = vsub.s32 0, %v1223
          %v1225 = vsel %vm1219, %v1224, %v1223
          %vm1226 = vcmp.ne.s32.totalorder %v1120, 0
          %vm1227 = vcmp.ne.s32.totalorder %v1127, 0
          %vm1228 = vcmp.ne.s32.totalorder %v1134, 0
          %vm1229 = vcmp.ne.s32.totalorder %v1141, 0
          %vm1230 = vcmp.ne.s32.totalorder %v1148, 0
          %vm1231 = vcmp.ne.s32.totalorder %v1155, 0
          %vm1232 = vcmp.ne.s32.totalorder %v1162, 0
          %vm1233 = vcmp.ne.s32.totalorder %v1169, 0
          %vm1234 = vcmp.ne.s32.totalorder %v1176, 0
          %vm1235 = vcmp.ne.s32.totalorder %v1183, 0
          %vm1236 = vcmp.ne.s32.totalorder %v1190, 0
          %vm1237 = vcmp.ne.s32.totalorder %v1197, 0
          %vm1238 = vcmp.ne.s32.totalorder %v1204, 0
          %vm1239 = vcmp.ne.s32.totalorder %v1211, 0
          %vm1240 = vcmp.ne.s32.totalorder %v1218, 0
          %vm1241 = vcmp.ne.s32.totalorder %v1225, 0
          %vm1242 = vcmp.lt.s32.totalorder %v1120, 0
          %vm1243 = vcmp.lt.s32.totalorder %v1127, 0
          %vm1244 = vcmp.lt.s32.totalorder %v1134, 0
          %vm1245 = vcmp.lt.s32.totalorder %v1141, 0
          %vm1246 = vcmp.lt.s32.totalorder %v1148, 0
          %vm1247 = vcmp.lt.s32.totalorder %v1155, 0
          %vm1248 = vcmp.lt.s32.totalorder %v1162, 0
          %vm1249 = vcmp.lt.s32.totalorder %v1169, 0
          %vm1250 = vcmp.lt.s32.totalorder %v1176, 0
          %vm1251 = vcmp.lt.s32.totalorder %v1183, 0
          %vm1252 = vcmp.lt.s32.totalorder %v1190, 0
          %vm1253 = vcmp.lt.s32.totalorder %v1197, 0
          %vm1254 = vcmp.lt.s32.totalorder %v1204, 0
          %vm1255 = vcmp.lt.s32.totalorder %v1211, 0
          %vm1256 = vcmp.lt.s32.totalorder %v1218, 0
          %vm1257 = vcmp.lt.s32.totalorder %v1225, 0
          %vm1258 = vmand %vm1242, %vm1226
          %vm1259 = vmand %vm1243, %vm1227
          %vm1260 = vmand %vm1244, %vm1228
          %vm1261 = vmand %vm1245, %vm1229
          %vm1262 = vmand %vm1246, %vm1230
          %vm1263 = vmand %vm1247, %vm1231
          %vm1264 = vmand %vm1248, %vm1232
          %vm1265 = vmand %vm1249, %vm1233
          %vm1266 = vmand %vm1250, %vm1234
          %vm1267 = vmand %vm1251, %vm1235
          %vm1268 = vmand %vm1252, %vm1236
          %vm1269 = vmand %vm1253, %vm1237
          %vm1270 = vmand %vm1254, %vm1238
          %vm1271 = vmand %vm1255, %vm1239
          %vm1272 = vmand %vm1256, %vm1240
          %vm1273 = vmand %vm1257, %vm1241
          %v1274 = vadd.s32 %v1120, 128
          %v1275 = vadd.s32 %v1127, 128
          %v1276 = vadd.s32 %v1134, 128
          %v1277 = vadd.s32 %v1141, 128
          %v1278 = vadd.s32 %v1148, 128
          %v1279 = vadd.s32 %v1155, 128
          %v1280 = vadd.s32 %v1162, 128
          %v1281 = vadd.s32 %v1169, 128
          %v1282 = vadd.s32 %v1176, 128
          %v1283 = vadd.s32 %v1183, 128
          %v1284 = vadd.s32 %v1190, 128
          %v1285 = vadd.s32 %v1197, 128
          %v1286 = vadd.s32 %v1204, 128
          %v1287 = vadd.s32 %v1211, 128
          %v1288 = vadd.s32 %v1218, 128
          %v1289 = vadd.s32 %v1225, 128
          %v1290 = vsel %vm1258, %v1274, %v1120
          %v1291 = vsel %vm1259, %v1275, %v1127
          %v1292 = vsel %vm1260, %v1276, %v1134
          %v1293 = vsel %vm1261, %v1277, %v1141
          %v1294 = vsel %vm1262, %v1278, %v1148
          %v1295 = vsel %vm1263, %v1279, %v1155
          %v1296 = vsel %vm1264, %v1280, %v1162
          %v1297 = vsel %vm1265, %v1281, %v1169
          %v1298 = vsel %vm1266, %v1282, %v1176
          %v1299 = vsel %vm1267, %v1283, %v1183
          %v1300 = vsel %vm1268, %v1284, %v1190
          %v1301 = vsel %vm1269, %v1285, %v1197
          %v1302 = vsel %vm1270, %v1286, %v1204
          %v1303 = vsel %vm1271, %v1287, %v1211
          %v1304 = vsel %vm1272, %v1288, %v1218
          %v1305 = vsel %vm1273, %v1289, %v1225
          %vm1306 = vcmp.lt.s32.totalorder %v1290, 8
          %vm1307 = vcmp.lt.s32.totalorder %v1291, 8
          %vm1308 = vcmp.lt.s32.totalorder %v1292, 8
          %vm1309 = vcmp.lt.s32.totalorder %v1293, 8
          %vm1310 = vcmp.lt.s32.totalorder %v1294, 8
          %vm1311 = vcmp.lt.s32.totalorder %v1295, 8
          %vm1312 = vcmp.lt.s32.totalorder %v1296, 8
          %vm1313 = vcmp.lt.s32.totalorder %v1297, 8
          %vm1314 = vcmp.lt.s32.totalorder %v1298, 8
          %vm1315 = vcmp.lt.s32.totalorder %v1299, 8
          %vm1316 = vcmp.lt.s32.totalorder %v1300, 8
          %vm1317 = vcmp.lt.s32.totalorder %v1301, 8
          %vm1318 = vcmp.lt.s32.totalorder %v1302, 8
          %vm1319 = vcmp.lt.s32.totalorder %v1303, 8
          %vm1320 = vcmp.lt.s32.totalorder %v1304, 8
          %vm1321 = vcmp.lt.s32.totalorder %v1305, 8
          %v1322 = vld [vmem:[#allocation4] sm:$0xff]
          %v1323 = vld [vmem:[#allocation4 + $0x8] sm:$0xff]
          %v1324 = vld [vmem:[#allocation4 + $0x10] sm:$0xff]
          %v1325 = vld [vmem:[#allocation4 + $0x18] sm:$0xff]
          %v1326 = vld [vmem:[#allocation4 + $0x20] sm:$0xff]
          %v1327 = vld [vmem:[#allocation4 + $0x28] sm:$0xff]
          %v1328 = vld [vmem:[#allocation4 + $0x30] sm:$0xff]
          %v1329 = vld [vmem:[#allocation4 + $0x38] sm:$0xff]
          %v1330 = vld [vmem:[#allocation4 + $0x40] sm:$0xff]
          %v1331 = vld [vmem:[#allocation4 + $0x48] sm:$0xff]
          %v1332 = vld [vmem:[#allocation4 + $0x50] sm:$0xff]
          %v1333 = vld [vmem:[#allocation4 + $0x58] sm:$0xff]
          %v1334 = vld [vmem:[#allocation4 + $0x60] sm:$0xff]
          %v1335 = vld [vmem:[#allocation4 + $0x68] sm:$0xff]
          %v1336 = vld [vmem:[#allocation4 + $0x70] sm:$0xff]
          %v1337 = vld [vmem:[#allocation4 + $0x78] sm:$0xff]
          %v1338 = vsub.f32 %v1098, %v1322
          %v1339 = vsub.f32 %v1099, %v1323
          %v1340 = vsub.f32 %v1100, %v1324
          %v1341 = vsub.f32 %v1101, %v1325
          %v1342 = vsub.f32 %v1102, %v1326
          %v1343 = vsub.f32 %v1103, %v1327
          %v1344 = vsub.f32 %v1104, %v1328
          %v1345 = vsub.f32 %v1105, %v1329
          %v1346 = vsub.f32 %v1106, %v1330
          %v1347 = vsub.f32 %v1107, %v1331
          %v1348 = vsub.f32 %v1108, %v1332
          %v1349 = vsub.f32 %v1109, %v1333
          %v1350 = vsub.f32 %v1110, %v1334
          %v1351 = vsub.f32 %v1111, %v1335
          %v1352 = vsub.f32 %v1112, %v1336
          %v1353 = vsub.f32 %v1113, %v1337
          %v1354 = vsel %vm1306, %v1338, 0.0
          %v1355 = vsel %vm1307, %v1339, 0.0
          %v1356 = vsel %vm1308, %v1340, 0.0
          %v1357 = vsel %vm1309, %v1341, 0.0
          %v1358 = vsel %vm1310, %v1342, 0.0
          %v1359 = vsel %vm1311, %v1343, 0.0
          %v1360 = vsel %vm1312, %v1344, 0.0
          %v1361 = vsel %vm1313, %v1345, 0.0
          %v1362 = vsel %vm1314, %v1346, 0.0
          %v1363 = vsel %vm1315, %v1347, 0.0
          %v1364 = vsel %vm1316, %v1348, 0.0
          %v1365 = vsel %vm1317, %v1349, 0.0
          %v1366 = vsel %vm1318, %v1350, 0.0
          %v1367 = vsel %vm1319, %v1351, 0.0
          %v1368 = vsel %vm1320, %v1352, 0.0
          %v1369 = vsel %vm1321, %v1353, 0.0
          %1370 = vst.msk [vmem:[%s191] sm:$0xff] %vm997, %v1354
          %1371 = vst.msk [vmem:[%s191 + $0x8] sm:$0xff] %vm997, %v1355
          %1372 = vst.msk [vmem:[%s191 + $0x10] sm:$0xff] %vm997, %v1356
          %1373 = vst.msk [vmem:[%s191 + $0x18] sm:$0xff] %vm997, %v1357
          %1374 = vst.msk [vmem:[%s191 + $0x20] sm:$0xff] %vm997, %v1358
          %1375 = vst.msk [vmem:[%s191 + $0x28] sm:$0xff] %vm997, %v1359
          %1376 = vst.msk [vmem:[%s191 + $0x30] sm:$0xff] %vm997, %v1360
          %1377 = vst.msk [vmem:[%s191 + $0x38] sm:$0xff] %vm997, %v1361
          %1378 = vst.msk [vmem:[%s191 + $0x40] sm:$0xff] %vm997, %v1362
          %1379 = vst.msk [vmem:[%s191 + $0x48] sm:$0xff] %vm997, %v1363
          %1380 = vst.msk [vmem:[%s191 + $0x50] sm:$0xff] %vm997, %v1364
          %1381 = vst.msk [vmem:[%s191 + $0x58] sm:$0xff] %vm997, %v1365
          %1382 = vst.msk [vmem:[%s191 + $0x60] sm:$0xff] %vm997, %v1366
          %1383 = vst.msk [vmem:[%s191 + $0x68] sm:$0xff] %vm997, %v1367
          %1384 = vst.msk [vmem:[%s191 + $0x70] sm:$0xff] %vm997, %v1368
          %1385 = vst.msk [vmem:[%s191 + $0x78] sm:$0xff] %vm997, %v1369
        $region48: #{tpu_custom_call.1} parent=27 // pred_fallthru
          _
        %s1386 = smul.u32 16, %s21
        %p1387 = scmp.lt.s32.totalorder %s1386, 31
        %s1388 = scalar_select %p1387, %s1386, 31
        %s1389 = smul.addr %s1388, 8
        %s1390 = scalar_lea.vmem %s2, %s1389
        // Predicated region
        $region49: #{tpu_custom_call.1} parent=27 // pred_check
          %p1391 = pneg %p94
        $region50: #{tpu_custom_call.1} parent=27 // pred_check_branch
          %1393 = sbr.rel (%p1391) target = $region52
        $region51: #{tpu_custom_call.1} parent=27 // pred_region
          %s1394 = smul.u32 16, %s21
        $region52: #{tpu_custom_call.1} parent=27 // pred_fallthru
          _
      $region28: #{tpu_custom_call.1} parent=5 // pred_fallthru
        _
      %p1395 = scmp.le.s32.totalorder 2, %s12
      // Predicated region
      $region53: #{tpu_custom_call.1} parent=5 // pred_check
        %p1396 = pneg %p1395
      $region54: #{tpu_custom_call.1} parent=5 // pred_check_branch
        %1398 = sbr.rel (%p1396) target = $region56
      $region55: #{tpu_custom_call.1} parent=5 // pred_region
        %s1399 = ssub.s32 %s12, 2
        // Predicated region
        $region57: #{tpu_custom_call.1} parent=55 // pred_check
          %p1400 = pneg %p100
        $region58: #{tpu_custom_call.1} parent=55 // pred_check_branch
          %1402 = sbr.rel (%p1400) target = $region60
        $region59: #{tpu_custom_call.1} parent=55 // pred_region
          %s1403 = smul.u32 16, %s23
          %p1404 = scmp.lt.s32.totalorder %s1403, 31
          %s1405 = scalar_select %p1404, %s1403, 31
          %s1406 = smul.addr %s1405, 8
          %s1407 = scalar_lea.vmem %s2, %s1406
        $region60: #{tpu_custom_call.1} parent=55 // pred_fallthru
          _
      $region56: #{tpu_custom_call.1} parent=5 // pred_fallthru
        _
    $region6: #{tpu_custom_call.1} parent=1 // loop_footer
      %s16 = sadd.s32 1, %s12
    $region7: #{tpu_custom_call.1} parent=1 // loop_footer_branch
      %11 = sbr.rel target = $region3
    $region8: #{tpu_custom_call.1} parent=1 // loop_exit
      _
    %1408 = vsyncpa [#allocation6], 1
    %s1409 = scalar_lea.sflag [#allocation6], 1
    %1410 = vsyncpa %s1409, 1
    %1411 = vsyncpa [#allocation8], 1

</llo_original>
